<compile_context>
chip_gen: v5e
topology: v5e:2x2
jax: 0.10.0
libtpu: 0.0.40
codegen_flags: <defaults>
</compile_context>

<pallas_src>
import functools

import jax
import jax.numpy as jnp
from jax import lax
from jax.experimental import pallas as pl
from jax.experimental.pallas import tpu as pltpu


def _round_up(x, m):
    return (x + m - 1) // m * m


def _pick_tile(dim, candidates=(512, 256, 128)):
    """Largest candidate tile (multiple of 128) that divides `dim` exactly.

    `dim` is always padded to a multiple of 128, so the last candidate hits.
    """
    for c in candidates:
        if dim % c == 0:
            return c
    return dim


# ----------------------------------------------------------------------------
# Fused kernel: stub encoders + BatchNorm1d(train) + ReLU + packed DynamicLinear
#   grid = (o_tiles, d_tiles); d (packed feature axis) is the reduction axis.
# ----------------------------------------------------------------------------
def _multibranch_fused_kernel(x_ref, ws_ref, g_ref, b_ref, wp_ref, bias_ref,
                              o_ref, acc_ref):
    d = pl.program_id(1)

    @pl.when(d == 0)
    def _():
        acc_ref[...] = jnp.zeros_like(acc_ref)

    # Stub encoders for this packed-feature tile (bf16 operands -> f32 acc).
    # TODO(synk): stands in for self.models[i](input, label, out_emb=True).
    emb = jnp.tanh(jnp.dot(x_ref[...], ws_ref[...],
                           preferred_element_type=jnp.float32))  # (bs, td) f32

    # BatchNorm1d, training mode, folded to one scale/shift (3 passes total).
    # Stats are per-feature over the FULL batch (batch never tiled) -> exact.
    # Single-pass variance E[x^2]-E[x]^2 is numerically safe ONLY because emb
    # is tanh-bounded in [-1, 1]; do not reuse for an unbounded real encoder.
    mean = jnp.mean(emb, axis=0, keepdims=True)                  # (1, td)
    var = jnp.mean(emb * emb, axis=0, keepdims=True) - mean * mean
    scale = g_ref[...] * lax.rsqrt(var + 1e-5)                   # EUP rsqrt
    shift = b_ref[...] - mean * scale
    y = jnp.maximum(emb * scale + shift, 0.0)                    # BN + ReLU

    # Partial block-diagonal projection for this (d, o) tile; f32 accumulate.
    acc_ref[...] += jnp.dot(y.astype(wp_ref.dtype), wp_ref[...],
                            preferred_element_type=jnp.float32)

    @pl.when(d == pl.num_programs(1) - 1)
    def _():
        # Lane-dense (bs, to) store; padded cols are exactly zero.
        o_ref[...] = (acc_ref[...] + bias_ref[...]).astype(o_ref.dtype)


# ----------------------------------------------------------------------------
# One-time packing of per-branch parameters into lane-aligned, block-diagonal
# operands.  Re-run only if current_out_dim changes (re_allocate).
# ----------------------------------------------------------------------------
def pack_params(params, in_feat):
    branches = params["branches"]
    d_ins = [int(p["w_stub"].shape[1]) for p in branches]
    out_dims = [int(p["current_out_dim"]) for p in branches]
    d_total = sum(d_ins)
    o_total = sum(out_dims)
    d_pad = _round_up(max(d_total, 1), 128)
    o_pad = _round_up(max(o_total, 1), 128)

    # Pad-safety invariant (correctness review): padded w_stub columns and
    # padded w_proj rows/cols MUST remain zero, padded gamma cols 1 / beta 0.
    # Then pad features give emb = tanh(0) = 0, BN keeps them exactly 0
    # (shift = beta - mean*scale = 0), and they contribute nothing downstream.
    ws = jnp.zeros((in_feat, d_pad), jnp.float32)
    gamma = jnp.ones((1, d_pad), jnp.float32)
    beta = jnp.zeros((1, d_pad), jnp.float32)
    wp = jnp.zeros((d_pad, o_pad), jnp.float32)
    bias = jnp.zeros((1, o_pad), jnp.float32)

    row, col = 0, 0
    for p, d_in, od in zip(branches, d_ins, out_dims):
        ws = ws.at[:, row:row + d_in].set(p["w_stub"])
        gamma = gamma.at[0, row:row + d_in].set(p["bn_gamma"])
        beta = beta.at[0, row:row + d_in].set(p["bn_beta"])
        # DynamicLinear slice weights1[:d_in, :current_out_dim] applied ONCE
        # here (changes only when re_allocate() runs), placed block-diagonally
        # so branches never mix.
        wp = wp.at[row:row + d_in, col:col + od].set(p["weights1"][:d_in, :od])
        bias = bias.at[0, col:col + od].set(p["bias1"][:od])
        row += d_in
        col += od
    assert row == d_total and col == o_total  # pads untouched by construction

    # bf16 MXU operands (v6e/v7x bf16 MXU path; halves weight HBM/VMEM bytes).
    return dict(w_stub=ws.astype(jnp.bfloat16),
                gamma=gamma, beta=beta,
                w_proj=wp.astype(jnp.bfloat16),
                bias=bias,
                total_emb_size=o_total, d_pad=d_pad, o_pad=o_pad)


# ----------------------------------------------------------------------------
# pallas_call wrapper with a real grid + BlockSpecs (pipelined DMA).
# ----------------------------------------------------------------------------
@functools.partial(jax.jit, static_argnames=("td", "to"))
def _fused_call(x, w_stub, gamma, beta, w_proj, bias, *, td, to):
    bs, in_feat = x.shape
    d_pad = w_stub.shape[1]
    o_pad = w_proj.shape[1]
    n_d = d_pad // td
    n_o = o_pad // to

    # Advisory cost hint for XLA's scheduler.
    flops = (2 * bs * in_feat * d_pad * n_o      # stub encoder (per o tile)
             + 2 * bs * d_pad * o_pad            # packed projection
             + 8 * bs * d_pad * n_o)             # BN fold + ReLU
    transcendentals = (bs * d_pad + d_pad) * n_o  # tanh + rsqrt
    bytes_accessed = (2 * x.size
                      + n_o * (2 * w_stub.size + 4 * gamma.size + 4 * beta.size)
                      + 2 * w_proj.size + 4 * bias.size + 4 * bs * o_pad)

    grid_spec = pltpu.PrefetchScalarGridSpec(
        num_scalar_prefetch=0,
        grid=(n_o, n_d),
        in_specs=[
            pl.BlockSpec((bs, in_feat), lambda o, d: (0, 0)),   # x: resident
            pl.BlockSpec((in_feat, td), lambda o, d: (0, d)),   # w_stub tile
            pl.BlockSpec((1, td), lambda o, d: (0, d)),         # gamma tile
            pl.BlockSpec((1, td), lambda o, d: (0, d)),         # beta tile
            pl.BlockSpec((td, to), lambda o, d: (d, o)),        # w_proj tile
            pl.BlockSpec((1, to), lambda o, d: (0, o)),         # bias tile
        ],
        out_specs=pl.BlockSpec((bs, to), lambda o, d: (0, o)),  # resident over d
        scratch_shapes=[pltpu.VMEM((bs, to), jnp.float32)],     # f32 accumulator
    )

    return pl.pallas_call(
        _multibranch_fused_kernel,
        out_shape=jax.ShapeDtypeStruct((bs, o_pad), jnp.float32),
        grid_spec=grid_spec,
        compiler_params=pltpu.CompilerParams(
            # Output tiles are independent (megacore-shardable on v7x); the
            # packed-feature axis is the projection's reduction axis.
            dimension_semantics=("parallel", "arbitrary"),
            # Explicit scoped-VMEM budget: raises v5e's 16 MiB default, stays
            # well inside v7x's 64 MiB physical VMEM.
            vmem_limit_bytes=32 * 1024 * 1024),
        cost_estimate=pl.CostEstimate(flops=flops,
                                      transcendentals=transcendentals,
                                      bytes_accessed=bytes_accessed),
    )(x, w_stub, gamma, beta, w_proj, bias)


# ----------------------------------------------------------------------------
# MultiBranch.forward(out_emb=True): returns {'embedding': total_emb}
# ----------------------------------------------------------------------------
def multibranch_forward(x, packed):
    td = _pick_tile(packed["d_pad"])
    to = _pick_tile(packed["o_pad"])
    # bf16 MXU operands; all post-matmul math stays f32 inside the kernel.
    out_pad = _fused_call(x.astype(jnp.bfloat16), packed["w_stub"],
                          packed["gamma"], packed["beta"], packed["w_proj"],
                          packed["bias"], td=td, to=to)
    # Static slice back from the lane-padded slab to total_emb_size
    # (matches torch.cat of the per-branch projections along dim=1).
    total_emb = out_pad[:, :packed["total_emb_size"]].astype(x.dtype)
    return {"embedding": total_emb}


# ----------------------------------------------------------------------------
# Deterministic parameter construction (mirrors the module __init__ shapes)
# ----------------------------------------------------------------------------
def build_params(key, in_feat, branch_emb_size, branch_emb_size_after_proj):
    branches = []
    for d_in, d_out in zip(branch_emb_size, branch_emb_size_after_proj):
        k_stub, k_w, key = jax.random.split(key, 3)
        max_out_dim = d_in * 2  # DynamicLinear(emb_size, emb_size*2, after_proj)

        # w1 = (2*rand - 1) / sqrt(input_dim)
        w1 = jax.random.uniform(k_w, (d_in, max_out_dim), dtype=jnp.float32)
        w1 = (2.0 * w1 - 1.0) / (d_in ** 0.5)

        branches.append(dict(
            w_stub=jax.random.normal(k_stub, (in_feat, d_in),
                                     dtype=jnp.float32) * 0.05,
            bn_gamma=jnp.ones((d_in,), jnp.float32),
            bn_beta=jnp.zeros((d_in,), jnp.float32),
            weights1=w1,
            bias1=jnp.zeros((max_out_dim,), jnp.float32),
            current_out_dim=d_out,
        ))
    return {"branches": branches}


# ----------------------------------------------------------------------------
# Plain-JAX references (per-branch, unfused) for checking
# ----------------------------------------------------------------------------
def reference_forward_f32(x, params):
    """f32 / HIGHEST-precision reference of the same forward."""
    embs = []
    for p in params["branches"]:
        e = jnp.tanh(jnp.dot(x, p["w_stub"], precision=lax.Precision.HIGHEST))
        mean = jnp.mean(e, axis=0, keepdims=True)
        var = jnp.mean((e - mean) ** 2, axis=0, keepdims=True)
        y = (e - mean) / jnp.sqrt(var + 1e-5)
        y = y * p["bn_gamma"] + p["bn_beta"]
        y = jnp.maximum(y, 0.0)
        d_in = e.shape[1]
        od = int(p["current_out_dim"])
        proj = jnp.dot(y, p["weights1"][:d_in, :od],
                       precision=lax.Precision.HIGHEST) + p["bias1"][:od]
        embs.append(proj)
    return jnp.concatenate(embs, axis=1)


def reference_forward_bf16(x, params):
    """Reference with the kernel's precision policy (bf16 operands, f32 acc /
    f32 elementwise) for a tight numerical check of the kernel structure."""
    xb = x.astype(jnp.bfloat16)
    embs = []
    for p in params["branches"]:
        e = jnp.tanh(jnp.dot(xb, p["w_stub"].astype(jnp.bfloat16),
                             preferred_element_type=jnp.float32))
        mean = jnp.mean(e, axis=0, keepdims=True)
        var = jnp.mean((e - mean) ** 2, axis=0, keepdims=True)
        scale = p["bn_gamma"] * lax.rsqrt(var + 1e-5)
        shift = p["bn_beta"] - mean * scale
        y = jnp.maximum(e * scale + shift, 0.0)
        d_in = e.shape[1]
        od = int(p["current_out_dim"])
        proj = jnp.dot(y.astype(jnp.bfloat16),
                       p["weights1"][:d_in, :od].astype(jnp.bfloat16),
                       preferred_element_type=jnp.float32) + p["bias1"][:od]
        embs.append(proj)
    return jnp.concatenate(embs, axis=1)


if __name__ == "__main__":
    # Synthetic config consistent with the module (branch_emb_proj=True):
    #   multi_branch_num = 2
    #   branch_emb_size            = [160, 224] -> packed D = 384 (3 feature tiles)
    #   branch_emb_size_after_proj = [96, 160]  -> total_emb_size = 256
    # Batch kept at 128 so MXU passes are not row-starved (perf review).
    bs, in_feat = 128, 256
    branch_emb_size = [160, 224]
    branch_emb_size_after_proj = [96, 160]
    total_emb_size = sum(branch_emb_size_after_proj)

    key = jax.random.PRNGKey(0)
    k_x, k_p = jax.random.split(key)
    x = jax.random.normal(k_x, (bs, in_feat), dtype=jnp.float32)
    params = build_params(k_p, in_feat, branch_emb_size,
                          branch_emb_size_after_proj)
    packed = pack_params(params, in_feat)

    out = multibranch_forward(x, packed)
    emb = jax.block_until_ready(out["embedding"])

    assert emb.shape == (bs, total_emb_size), emb.shape
    assert bool(jnp.all(jnp.isfinite(emb)))

    # Tight check vs a reference that mirrors the kernel's precision policy.
    ref_bf16 = jax.block_until_ready(reference_forward_bf16(x, params))
    assert bool(jnp.allclose(emb, ref_bf16, rtol=2e-3, atol=2e-3)), (
        float(jnp.max(jnp.abs(emb - ref_bf16))))

    # Loose check vs the f32 HIGHEST-precision reference (kernel uses bf16
    # MXU operands, so tolerance is wider than the old all-f32 version).
    ref_f32 = jax.block_until_ready(reference_forward_f32(x, params))
    assert bool(jnp.allclose(emb, ref_f32, rtol=3e-2, atol=3e-2)), (
        float(jnp.max(jnp.abs(emb - ref_f32))))

    print("KERNEL_OK")
</pallas_src>

<mosaic_0001>
module attributes {stable_mosaic.version = 11 : i64} {
  func.func @_multibranch_fused_kernel(%arg0: i32, %arg1: i32, %arg2: memref<128x256xbf16, #tpu.memory_space<vmem>>, %arg3: memref<256x128xbf16, #tpu.memory_space<vmem>>, %arg4: memref<1x128xf32, #tpu.memory_space<vmem>>, %arg5: memref<1x128xf32, #tpu.memory_space<vmem>>, %arg6: memref<128x256xbf16, #tpu.memory_space<vmem>>, %arg7: memref<1x256xf32, #tpu.memory_space<vmem>>, %arg8: memref<128x256xf32, #tpu.memory_space<vmem>>, %arg9: memref<128x256xf32, #tpu.memory_space<vmem>>) attributes {dimension_semantics = [#tpu.dimension_semantics<parallel>, #tpu.dimension_semantics<arbitrary>], iteration_bounds = array<i64: 1, 3>, scalar_prefetch = 0 : i64, scratch_operands = 1 : i64, tpu.core_type = #tpu.core_type<tc>, window_params = [{pipeline_mode = #tpu.pipeline_mode<synchronous>, transform_indices = @transform_0, window_bounds = array<i64: 128, 256>}, {transform_indices = @transform_1, window_bounds = array<i64: 256, 128>}, {transform_indices = @transform_2, window_bounds = array<i64: 1, 128>}, {transform_indices = @transform_3, window_bounds = array<i64: 1, 128>}, {transform_indices = @transform_4, window_bounds = array<i64: 128, 256>}, {transform_indices = @transform_5, window_bounds = array<i64: 1, 256>}, {transform_indices = @transform_6, window_bounds = array<i64: 128, 256>}]} {
    %c0_i32 = arith.constant 0 : i32
    %0 = arith.cmpi eq, %arg1, %c0_i32 : i32
    %1 = arith.extui %0 : i1 to i32
    %c0_i32_0 = arith.constant 0 : i32
    %2 = arith.cmpi ne, %1, %c0_i32_0 : i32
    scf.if %2 {
      %cst_22 = arith.constant 0.000000e+00 : f32
      %41 = vector.broadcast %cst_22 : f32 to vector<128x256xf32>
      %c0_23 = arith.constant 0 : index
      %c0_24 = arith.constant 0 : index
      %42 = vector.load %arg9[%c0_23, %c0_24] : memref<128x256xf32, #tpu.memory_space<vmem>>, vector<128x256xf32>
      tpu.vector_store %arg9[%c0_23, %c0_24], %41 {strides = array<i32>} : memref<128x256xf32, #tpu.memory_space<vmem>>, vector<128x256xf32>,
    } else {
    }
    %c0 = arith.constant 0 : index
    %c0_1 = arith.constant 0 : index
    %3 = vector.load %arg2[%c0, %c0_1] : memref<128x256xbf16, #tpu.memory_space<vmem>>, vector<128x256xbf16>
    %c0_2 = arith.constant 0 : index
    %c0_3 = arith.constant 0 : index
    %4 = vector.load %arg3[%c0_2, %c0_3] : memref<256x128xbf16, #tpu.memory_space<vmem>>, vector<256x128xbf16>
    %cst = arith.constant dense<0.000000e+00> : vector<128x128xf32>
    %5 = tpu.matmul %3, %4, %cst {dimension_numbers = #tpu.dot_dimension_numbers<[1], [0], [0], [1], [0, 0, 1, 1], [], []>} : vector<128x256xbf16>, vector<256x128xbf16>, vector<128x128xf32> -> vector<128x128xf32>
    %6 = math.tanh %5 : vector<128x128xf32>
    %cst_4 = arith.constant dense<0.000000e+00> : vector<128xf32>
    %7 = vector.multi_reduction <add>, %6, %cst_4 [0] : vector<128x128xf32> to vector<128xf32>
    %8 = vector.shape_cast %7 : vector<128xf32> to vector<1x128xf32>
    %cst_5 = arith.constant 1.280000e+02 : f32
    %9 = vector.broadcast %cst_5 : f32 to vector<1x128xf32>
    %10 = arith.divf %8, %9 : vector<1x128xf32>
    %11 = arith.mulf %6, %6 : vector<128x128xf32>
    %cst_6 = arith.constant dense<0.000000e+00> : vector<128xf32>
    %12 = vector.multi_reduction <add>, %11, %cst_6 [0] : vector<128x128xf32> to vector<128xf32>
    %13 = vector.shape_cast %12 : vector<128xf32> to vector<1x128xf32>
    %cst_7 = arith.constant 1.280000e+02 : f32
    %14 = vector.broadcast %cst_7 : f32 to vector<1x128xf32>
    %15 = arith.divf %13, %14 : vector<1x128xf32>
    %16 = arith.mulf %10, %10 : vector<1x128xf32>
    %17 = arith.subf %15, %16 : vector<1x128xf32>
    %c0_8 = arith.constant 0 : index
    %c0_9 = arith.constant 0 : index
    %18 = vector.load %arg4[%c0_8, %c0_9] : memref<1x128xf32, #tpu.memory_space<vmem>>, vector<1x128xf32>
    %cst_10 = arith.constant 9.99999974E-6 : f32
    %19 = vector.broadcast %cst_10 : f32 to vector<1x128xf32>
    %20 = arith.addf %17, %19 : vector<1x128xf32>
    %21 = math.rsqrt %20 : vector<1x128xf32>
    %22 = arith.mulf %18, %21 : vector<1x128xf32>
    %c0_11 = arith.constant 0 : index
    %c0_12 = arith.constant 0 : index
    %23 = vector.load %arg5[%c0_11, %c0_12] : memref<1x128xf32, #tpu.memory_space<vmem>>, vector<1x128xf32>
    %24 = arith.mulf %10, %22 : vector<1x128xf32>
    %25 = arith.subf %23, %24 : vector<1x128xf32>
    %26 = vector.broadcast %22 : vector<1x128xf32> to vector<128x128xf32>
    %27 = arith.mulf %6, %26 : vector<128x128xf32>
    %28 = vector.broadcast %25 : vector<1x128xf32> to vector<128x128xf32>
    %29 = arith.addf %27, %28 : vector<128x128xf32>
    %cst_13 = arith.constant 0.000000e+00 : f32
    %30 = vector.broadcast %cst_13 : f32 to vector<128x128xf32>
    %31 = arith.maximumf %29, %30 : vector<128x128xf32>
    %c0_14 = arith.constant 0 : index
    %c0_15 = arith.constant 0 : index
    %32 = vector.load %arg9[%c0_14, %c0_15] : memref<128x256xf32, #tpu.memory_space<vmem>>, vector<128x256xf32>
    %33 = arith.truncf %31 : vector<128x128xf32> to vector<128x128xbf16>
    %c0_16 = arith.constant 0 : index
    %c0_17 = arith.constant 0 : index
    %34 = vector.load %arg6[%c0_16, %c0_17] : memref<128x256xbf16, #tpu.memory_space<vmem>>, vector<128x256xbf16>
    %cst_18 = arith.constant dense<0.000000e+00> : vector<128x256xf32>
    %35 = tpu.matmul %33, %34, %cst_18 {dimension_numbers = #tpu.dot_dimension_numbers<[1], [0], [0], [1], [0, 0, 1, 1], [], []>} : vector<128x128xbf16>, vector<128x256xbf16>, vector<128x256xf32> -> vector<128x256xf32>
    %36 = arith.addf %32, %35 : vector<128x256xf32>
    %c0_19 = arith.constant 0 : index
    %c0_20 = arith.constant 0 : index
    %37 = vector.load %arg9[%c0_19, %c0_20] : memref<128x256xf32, #tpu.memory_space<vmem>>, vector<128x256xf32>
    tpu.vector_store %arg9[%c0_19, %c0_20], %36 {strides = array<i32>} : memref<128x256xf32, #tpu.memory_space<vmem>>, vector<128x256xf32>,
    %c2_i32 = arith.constant 2 : i32
    %38 = arith.cmpi eq, %arg1, %c2_i32 : i32
    %39 = arith.extui %38 : i1 to i32
    %c0_i32_21 = arith.constant 0 : i32
    %40 = arith.cmpi ne, %39, %c0_i32_21 : i32
    scf.if %40 {
      %c0_22 = arith.constant 0 : index
      %c0_23 = arith.constant 0 : index
      %41 = vector.load %arg9[%c0_22, %c0_23] : memref<128x256xf32, #tpu.memory_space<vmem>>, vector<128x256xf32>
      %c0_24 = arith.constant 0 : index
      %c0_25 = arith.constant 0 : index
      %42 = vector.load %arg7[%c0_24, %c0_25] : memref<1x256xf32, #tpu.memory_space<vmem>>, vector<1x256xf32>
      %43 = vector.broadcast %42 : vector<1x256xf32> to vector<128x256xf32>
      %44 = arith.addf %41, %43 : vector<128x256xf32>
      %c0_26 = arith.constant 0 : index
      %c0_27 = arith.constant 0 : index
      %45 = vector.load %arg8[%c0_26, %c0_27] : memref<128x256xf32, #tpu.memory_space<vmem>>, vector<128x256xf32>
      tpu.vector_store %arg8[%c0_26, %c0_27], %44 {strides = array<i32>} : memref<128x256xf32, #tpu.memory_space<vmem>>, vector<128x256xf32>,
    } else {
    }
    return
  }
  func.func @transform_0(%arg0: i32, %arg1: i32) -> (i32, i32) {
    %c0_i32 = arith.constant 0 : i32
    %c0_i32_0 = arith.constant 0 : i32
    %c0_i32_1 = arith.constant 0 : i32
    return %c0_i32, %c0_i32_0 : i32, i32
  }
  func.func @transform_1(%arg0: i32, %arg1: i32) -> (i32, i32) {
    %c0_i32 = arith.constant 0 : i32
    %c0_i32_0 = arith.constant 0 : i32
    return %c0_i32, %arg1 : i32, i32
  }
  func.func @transform_2(%arg0: i32, %arg1: i32) -> (i32, i32) {
    %c0_i32 = arith.constant 0 : i32
    %c0_i32_0 = arith.constant 0 : i32
    return %c0_i32, %arg1 : i32, i32
  }
  func.func @transform_3(%arg0: i32, %arg1: i32) -> (i32, i32) {
    %c0_i32 = arith.constant 0 : i32
    %c0_i32_0 = arith.constant 0 : i32
    return %c0_i32, %arg1 : i32, i32
  }
  func.func @transform_4(%arg0: i32, %arg1: i32) -> (i32, i32) {
    %c0_i32 = arith.constant 0 : i32
    return %arg1, %arg0 : i32, i32
  }
  func.func @transform_5(%arg0: i32, %arg1: i32) -> (i32, i32) {
    %c0_i32 = arith.constant 0 : i32
    %c0_i32_0 = arith.constant 0 : i32
    return %c0_i32, %arg0 : i32, i32
  }
  func.func @transform_6(%arg0: i32, %arg1: i32) -> (i32, i32) {
    %c0_i32 = arith.constant 0 : i32
    %c0_i32_0 = arith.constant 0 : i32
    return %c0_i32, %arg0 : i32, i32
  }
}

</mosaic_0001>

<llo_original>
// kernel: _fused_call.1
$region0: #{_fused_call.1}
  #allocation0 [shape = 'u32[]', space=smem, size = 0x4, offset = 0x4, fixed_abs, tag = 'smem constant byte address 0x4 - core index']
  #allocation1 [shape = 'u32[72,128]{1,0:T(1,128)}', space=vmem, size = 0x9000, scoped, tag = 'internal scratch']
  #allocation2 [shape = 'f32[128,256]{1,0:T(8,128)}', space=vmem, size = 0x20000, scoped, tag = 'scratch operand']
  %s0 = inlined_call_operand.hbm [shape: bf16[128,256], index: 0, kind: input, shape index: {}]
  %s1 = inlined_call_operand.hbm [shape: bf16[256,384], index: 1, kind: input, shape index: {}]
  %s2 = inlined_call_operand.hbm [shape: f32[1,384], index: 2, kind: input, shape index: {}]
  %s3 = inlined_call_operand.hbm [shape: f32[1,384], index: 3, kind: input, shape index: {}]
  %s4 = inlined_call_operand.hbm [shape: bf16[384,256], index: 4, kind: input, shape index: {}]
  %s5 = inlined_call_operand.vmem [shape: f32[1,256], index: 5, kind: input, shape index: {}]
  %s6 = inlined_call_operand.hbm [shape: f32[128,256], index: 6, kind: output, shape index: {}]
  %s7 = sld [smem:[#allocation0]]
  $region85: #{_fused_call.1} parent=0
    _
  %s9 = ssub.s32 1, %s7
  %s10 = scalar_select 0, %s9, %s7
  $region1: #{_fused_call.1} parent=0
    #allocation3 [shape = 'u8[65536]{0}', space=vmem, size = 0x10000, scoped, tag = 'input window, operand 0, single buffered']
    #allocation4 [shape = 's32[2]{0}', space=sflag, size = 0x8, scoped, tag = 'scoped memory for _fused_call.1']
    #allocation5 [shape = 's32[2]{0}', space=sflag, size = 0x8, scoped, tag = 'scoped memory for _fused_call.1']
    #allocation6 [shape = 'u8[131072]{0}', space=vmem, size = 0x20000, scoped, tag = 'input window, operand 1']
    #allocation7 [shape = 's32[2]{0}', space=sflag, size = 0x8, scoped, tag = 'scoped memory for _fused_call.1']
    #allocation8 [shape = 'u8[1024]{0}', space=vmem, size = 0x400, scoped, tag = 'input window, operand 2']
    #allocation9 [shape = 'u8[1024]{0}', space=vmem, size = 0x400, scoped, tag = 'input window, operand 3']
    #allocation10 [shape = 's32[2]{0}', space=sflag, size = 0x8, scoped, tag = 'scoped memory for _fused_call.1']
    #allocation11 [shape = 'u8[131072]{0}', space=vmem, size = 0x20000, scoped, tag = 'input window, operand 4']
    #allocation12 [shape = 'u8[131072]{0}', space=vmem, size = 0x20000, scoped, tag = 'output window, operand 0, single buffered']
    %11 = vsyncpa [#allocation4], 0
    %12 = vsyncpa [#allocation7], 0
    %s13 = scalar_lea.sflag [#allocation7], 1
    %14 = vsyncpa %s13, 0
    %15 = vsyncpa [#allocation10], 0
    %s16 = scalar_lea.sflag [#allocation10], 1
    %17 = vsyncpa %s16, 0
    %18 = vsyncpa [#allocation5], 0
    loop: start=0, step=1, limit=5
    $region2: #{_fused_call.1} parent=1 // loop_pre_header
      _
    $region3: #{_fused_call.1} parent=1 // loop_header
      %s20 = sphi 0, %s24
      %p21 = scmp.ge.s32.totalorder %s20, 5
      %s27 = sphi 0, %s39
      %s28 = sphi 0, %s35
      %s29 = sphi 0, %s27
      %s30 = sphi 0, %s28
      %s31 = sphi 0, %s29
      %s32 = sphi 0, %s30
      %s40 = sphi 0, %s40
      %s42 = sphi 0, %s40
      %s43 = sphi 0, %s42
      %s57 = sphi 0, %s43
      %s63 = sphi 0, %s65
      %s66 = sphi 0, %s63
      %s67 = sphi 0, %s66
      %s83 = sphi 0, %s67
      %s89 = sphi 0, %s91
      %s92 = sphi 0, %s89
      %s93 = sphi 0, %s92
      %s109 = sphi 0, %s93
      %s115 = sphi 0, %s117
      %s118 = sphi 0, %s115
      %s119 = sphi 0, %s118
      %s135 = sphi 0, %s119
      %s143 = sphi 0, %s145
      %s146 = sphi 0, %s143
      %s147 = sphi 0, %s146
      %s163 = sphi 0, %s147
      %s169 = sphi 0, %s171
      %s172 = sphi 0, %s169
      %s173 = sphi 0, %s172
      %s189 = sphi 0, %s173
      %s195 = sphi 0, %s197
      %s198 = sphi 0, %s195
      %s199 = sphi 0, %s198
      %s215 = sphi 0, %s199
    $region4: #{_fused_call.1} parent=1 // loop_header_branch
      %23 = sbr.rel (%p21) target = $region8
    $region5: #{_fused_call.1} parent=1 // loop_body
      %s25 = ssub.s32 %s20, 1
      %s26 = ssub.s32 %s20, 2
      %s33 = sadd.s32 1, %s28
      %p34 = scmp.ge.s32.totalorder %s33, 3
      %s35 = scalar_select %p34, 0, %s33
      %s36 = sadd.s32 1, %s27
      %s37 = scalar_select %p34, %s36, %s27
      %p38 = scmp.ge.s32.totalorder %s37, 1
      %s39 = scalar_select %p38, 0, %s37
      %s41 = sadd.s32 %s40, 1
      %p44 = scmp.eq.s32.totalorder %s20, 2
      %p45 = scmp.ne.s32.totalorder %s40, %s42
      %p46 = scmp.eq.s32.totalorder %s20, 0
      %p47 = por %p45, %p46
      %p48 = scmp.ne.s32.totalorder %s40, %s42
      %p49 = scmp.eq.s32.totalorder %s25, 2
      %p50 = por %p48, %p49
      %p51 = scmp.ne.s32.totalorder %s42, %s43
      %p52 = scmp.eq.s32.totalorder %s25, 0
      %p53 = por %p51, %p52
      %p54 = scmp.ne.s32.totalorder %s42, %s43
      %p55 = scmp.eq.s32.totalorder %s26, 2
      %p56 = por %p54, %p55
      %p58 = scmp.ne.s32.totalorder %s43, %s57
      %p59 = scmp.eq.s32.totalorder %s26, 0
      %p60 = por %p58, %p59
      %s61 = ssub.s32 %s28, %s35
      %p62 = scmp.eq.s32.totalorder %s61, 0
      %s64 = sadd.s32 %s63, 1
      %s65 = scalar_select %p62, %s63, %s64
      %p68 = pneg %p62
      %p69 = scmp.eq.s32.totalorder %s20, 2
      %p70 = por %p68, %p69
      %p71 = scmp.ne.s32.totalorder %s63, %s66
      %p72 = scmp.eq.s32.totalorder %s20, 0
      %p73 = por %p71, %p72
      %p74 = scmp.ne.s32.totalorder %s63, %s66
      %p75 = scmp.eq.s32.totalorder %s25, 2
      %p76 = por %p74, %p75
      %p77 = scmp.ne.s32.totalorder %s66, %s67
      %p78 = scmp.eq.s32.totalorder %s25, 0
      %p79 = por %p77, %p78
      %p80 = scmp.ne.s32.totalorder %s66, %s67
      %p81 = scmp.eq.s32.totalorder %s26, 2
      %p82 = por %p80, %p81
      %p84 = scmp.ne.s32.totalorder %s67, %s83
      %p85 = scmp.eq.s32.totalorder %s26, 0
      %p86 = por %p84, %p85
      %s87 = ssub.s32 %s28, %s35
      %p88 = scmp.eq.s32.totalorder %s87, 0
      %s90 = sadd.s32 %s89, 1
      %s91 = scalar_select %p88, %s89, %s90
      %p94 = pneg %p88
      %p95 = scmp.eq.s32.totalorder %s20, 2
      %p96 = por %p94, %p95
      %p97 = scmp.ne.s32.totalorder %s89, %s92
      %p98 = scmp.eq.s32.totalorder %s20, 0
      %p99 = por %p97, %p98
      %p100 = scmp.ne.s32.totalorder %s89, %s92
      %p101 = scmp.eq.s32.totalorder %s25, 2
      %p102 = por %p100, %p101
      %p103 = scmp.ne.s32.totalorder %s92, %s93
      %p104 = scmp.eq.s32.totalorder %s25, 0
      %p105 = por %p103, %p104
      %p106 = scmp.ne.s32.totalorder %s92, %s93
      %p107 = scmp.eq.s32.totalorder %s26, 2
      %p108 = por %p106, %p107
      %p110 = scmp.ne.s32.totalorder %s93, %s109
      %p111 = scmp.eq.s32.totalorder %s26, 0
      %p112 = por %p110, %p111
      %s113 = ssub.s32 %s28, %s35
      %p114 = scmp.eq.s32.totalorder %s113, 0
      %s116 = sadd.s32 %s115, 1
      %s117 = scalar_select %p114, %s115, %s116
      %p120 = pneg %p114
      %p121 = scmp.eq.s32.totalorder %s20, 2
      %p122 = por %p120, %p121
      %p123 = scmp.ne.s32.totalorder %s115, %s118
      %p124 = scmp.eq.s32.totalorder %s20, 0
      %p125 = por %p123, %p124
      %p126 = scmp.ne.s32.totalorder %s115, %s118
      %p127 = scmp.eq.s32.totalorder %s25, 2
      %p128 = por %p126, %p127
      %p129 = scmp.ne.s32.totalorder %s118, %s119
      %p130 = scmp.eq.s32.totalorder %s25, 0
      %p131 = por %p129, %p130
      %p132 = scmp.ne.s32.totalorder %s118, %s119
      %p133 = scmp.eq.s32.totalorder %s26, 2
      %p134 = por %p132, %p133
      %p136 = scmp.ne.s32.totalorder %s119, %s135
      %p137 = scmp.eq.s32.totalorder %s26, 0
      %p138 = por %p136, %p137
      %s139 = ssub.s32 %s28, %s35
      %s140 = ssub.s32 %s27, %s39
      %s141 = sor.u32 %s139, %s140
      %p142 = scmp.eq.s32.totalorder %s141, 0
      %s144 = sadd.s32 %s143, 1
      %s145 = scalar_select %p142, %s143, %s144
      %p148 = pneg %p142
      %p149 = scmp.eq.s32.totalorder %s20, 2
      %p150 = por %p148, %p149
      %p151 = scmp.ne.s32.totalorder %s143, %s146
      %p152 = scmp.eq.s32.totalorder %s20, 0
      %p153 = por %p151, %p152
      %p154 = scmp.ne.s32.totalorder %s143, %s146
      %p155 = scmp.eq.s32.totalorder %s25, 2
      %p156 = por %p154, %p155
      %p157 = scmp.ne.s32.totalorder %s146, %s147
      %p158 = scmp.eq.s32.totalorder %s25, 0
      %p159 = por %p157, %p158
      %p160 = scmp.ne.s32.totalorder %s146, %s147
      %p161 = scmp.eq.s32.totalorder %s26, 2
      %p162 = por %p160, %p161
      %p164 = scmp.ne.s32.totalorder %s147, %s163
      %p165 = scmp.eq.s32.totalorder %s26, 0
      %p166 = por %p164, %p165
      %s167 = ssub.s32 %s27, %s39
      %p168 = scmp.eq.s32.totalorder %s167, 0
      %s170 = sadd.s32 %s169, 1
      %s171 = scalar_select %p168, %s169, %s170
      %p174 = pneg %p168
      %p175 = scmp.eq.s32.totalorder %s20, 2
      %p176 = por %p174, %p175
      %p177 = scmp.ne.s32.totalorder %s169, %s172
      %p178 = scmp.eq.s32.totalorder %s20, 0
      %p179 = por %p177, %p178
      %p180 = scmp.ne.s32.totalorder %s169, %s172
      %p181 = scmp.eq.s32.totalorder %s25, 2
      %p182 = por %p180, %p181
      %p183 = scmp.ne.s32.totalorder %s172, %s173
      %p184 = scmp.eq.s32.totalorder %s25, 0
      %p185 = por %p183, %p184
      %p186 = scmp.ne.s32.totalorder %s172, %s173
      %p187 = scmp.eq.s32.totalorder %s26, 2
      %p188 = por %p186, %p187
      %p190 = scmp.ne.s32.totalorder %s173, %s189
      %p191 = scmp.eq.s32.totalorder %s26, 0
      %p192 = por %p190, %p191
      %s193 = ssub.s32 %s27, %s39
      %p194 = scmp.eq.s32.totalorder %s193, 0
      %s196 = sadd.s32 %s195, 1
      %s197 = scalar_select %p194, %s195, %s196
      %p200 = pneg %p194
      %p201 = scmp.eq.s32.totalorder %s20, 2
      %p202 = por %p200, %p201
      %p203 = scmp.ne.s32.totalorder %s195, %s198
      %p204 = scmp.eq.s32.totalorder %s20, 0
      %p205 = por %p203, %p204
      %p206 = scmp.ne.s32.totalorder %s195, %s198
      %p207 = scmp.eq.s32.totalorder %s25, 2
      %p208 = por %p206, %p207
      %p209 = scmp.ne.s32.totalorder %s198, %s199
      %p210 = scmp.eq.s32.totalorder %s25, 0
      %p211 = por %p209, %p210
      %p212 = scmp.ne.s32.totalorder %s198, %s199
      %p213 = scmp.eq.s32.totalorder %s26, 2
      %p214 = por %p212, %p213
      %p216 = scmp.ne.s32.totalorder %s199, %s215
      %p217 = scmp.eq.s32.totalorder %s26, 0
      %p218 = por %p216, %p217
      %p219 = scmp.le.s32.totalorder 1, %s20
      %p220 = scmp.lt.s32.totalorder %s20, 4
      %p221 = pnand %p219, %p220
      %p222 = pneg %p221
      // Predicated region
      $region9: #{_fused_call.1} parent=5 // pred_check
        _
      $region10: #{_fused_call.1} parent=5 // pred_check_branch
        %224 = sbr.rel (%p221) target = $region12
      $region11: #{_fused_call.1} parent=5 // pred_region
        %s225 = ssub.s32 %s20, 1
        // Predicated region
        $region13: #{_fused_call.1} parent=11 // pred_check
          %p226 = pneg %p53
        $region14: #{_fused_call.1} parent=11 // pred_check_branch
          %228 = sbr.rel (%p226) target = $region16
        $region15: #{_fused_call.1} parent=11 // pred_region
          %230 = vsyncadd [#allocation4], 0
          %s231 = sshll.u32 %s0, 4
          %s232 = int_to_ptr.hbm [resolvable:$true] %s231
          %s233 = sshll.u32 [#allocation3], 4
          %s234 = int_to_ptr.vmem [resolvable:$true] %s233
          %239 = dma.hbm_to_vmem [thread:$0]  %s232, 2048, %s234, [#allocation4], 128, 128, 8
        $region16: #{_fused_call.1} parent=11 // pred_fallthru
          _
        // Predicated region
        $region17: #{_fused_call.1} parent=11 // pred_check
          %p240 = pneg %p185
        $region18: #{_fused_call.1} parent=11 // pred_check_branch
          %242 = sbr.rel (%p240) target = $region20
        $region19: #{_fused_call.1} parent=11 // pred_region
          %s243 = smul.u32 2, %s29
          %p244 = scmp.lt.s32.totalorder %s243, 1
          %s245 = scalar_select %p244, %s243, 1
          %s246 = scalar_lea.vmem %s5, %s245
          %s247 = smul.u32 2, %s29
        $region20: #{_fused_call.1} parent=11 // pred_fallthru
          _
      $region12: #{_fused_call.1} parent=5 // pred_fallthru
        _
      %p248 = scmp.lt.s32.totalorder %s20, 3
      // Predicated region
      $region21: #{_fused_call.1} parent=5 // pred_check
        %p249 = pneg %p248
      $region22: #{_fused_call.1} parent=5 // pred_check_branch
        %251 = sbr.rel (%p249) target = $region24
      $region23: #{_fused_call.1} parent=5 // pred_region
        // Predicated region
        $region25: #{_fused_call.1} parent=23 // pred_check
          %p252 = pneg %p73
        $region26: #{_fused_call.1} parent=23 // pred_check_branch
          %254 = sbr.rel (%p252) target = $region28
        $region27: #{_fused_call.1} parent=23 // pred_region
          %s255 = sand.u32 %s20, 1
          %s256 = scalar_lea.sflag [#allocation7], %s255
          %s257 = sand.u32 %s63, 1
          %s258 = smul.addr %s257, 128
          %s259 = scalar_lea.vmem [#allocation6], %s258
          %261 = vsyncadd %s256, 0
          %s262 = smul.addr %s28, 4
          %s263 = scalar_lea.hbm %s1, %s262
          %s264 = sshll.u32 %s263, 4
          %s265 = int_to_ptr.hbm [resolvable:$true] %s264
          %s266 = sshll.u32 %s259, 4
          %s267 = int_to_ptr.vmem [resolvable:$true] %s266
          %272 = dma.hbm_to_vmem [thread:$0]  %s265, 2048, %s267, %s256, 192, 64, 4
        $region28: #{_fused_call.1} parent=23 // pred_fallthru
          _
        // Predicated region
        $region29: #{_fused_call.1} parent=23 // pred_check
          %p273 = pneg %p99
        $region30: #{_fused_call.1} parent=23 // pred_check_branch
          %275 = sbr.rel (%p273) target = $region32
        $region31: #{_fused_call.1} parent=23 // pred_region
          %s276 = sand.u32 %s20, 1
          %s277 = scalar_lea.sflag [#allocation7], %s276
          %s278 = sand.u32 %s89, 1
          %s279 = scalar_lea.vmem [#allocation8], %s278
          %281 = vsyncadd %s277, 0
          %s282 = scalar_lea.hbm %s2, %s28
          %s284 = sshll.u32 %s282, 4
          %s285 = int_to_ptr.hbm [resolvable:$true] %s284
          %s286 = sshll.u32 %s279, 4
          %s287 = int_to_ptr.vmem [resolvable:$true] %s286
          %289 = dma.hbm_to_vmem [thread:$0]  %s285, 16, %s287, %s277
        $region32: #{_fused_call.1} parent=23 // pred_fallthru
          _
        // Predicated region
        $region33: #{_fused_call.1} parent=23 // pred_check
          %p290 = pneg %p125
        $region34: #{_fused_call.1} parent=23 // pred_check_branch
          %292 = sbr.rel (%p290) target = $region36
        $region35: #{_fused_call.1} parent=23 // pred_region
          %s293 = sand.u32 %s20, 1
          %s294 = scalar_lea.sflag [#allocation10], %s293
          %s295 = sand.u32 %s115, 1
          %s296 = scalar_lea.vmem [#allocation9], %s295
          %298 = vsyncadd %s294, 0
          %s299 = scalar_lea.hbm %s3, %s28
          %s301 = sshll.u32 %s299, 4
          %s302 = int_to_ptr.hbm [resolvable:$true] %s301
          %s303 = sshll.u32 %s296, 4
          %s304 = int_to_ptr.vmem [resolvable:$true] %s303
          %306 = dma.hbm_to_vmem [thread:$0]  %s302, 16, %s304, %s294
        $region36: #{_fused_call.1} parent=23 // pred_fallthru
          _
        // Predicated region
        $region37: #{_fused_call.1} parent=23 // pred_check
          %p307 = pneg %p153
        $region38: #{_fused_call.1} parent=23 // pred_check_branch
          %309 = sbr.rel (%p307) target = $region40
        $region39: #{_fused_call.1} parent=23 // pred_region
          %s310 = sand.u32 %s20, 1
          %s311 = scalar_lea.sflag [#allocation10], %s310
          %s312 = sand.u32 %s143, 1
          %s313 = smul.addr %s312, 128
          %s314 = scalar_lea.vmem [#allocation11], %s313
          %s315 = smul.u32 16, %s28
          %s316 = smul.u32 2, %s27
          %318 = vsyncadd %s311, 0
          %s319 = smul.addr %s315, 2
          %s320 = sadd.s32 %s316, %s319
          %s321 = smul.addr %s320, 4
          %s322 = scalar_lea.hbm %s4, %s321
          %s323 = sshll.u32 %s322, 4
          %s324 = int_to_ptr.hbm [resolvable:$true] %s323
          %s325 = sshll.u32 %s314, 4
          %s326 = int_to_ptr.vmem [resolvable:$true] %s325
          %331 = dma.hbm_to_vmem [thread:$0]  %s324, 2048, %s326, %s311, 128, 128, 8
        $region40: #{_fused_call.1} parent=23 // pred_fallthru
          _
      $region24: #{_fused_call.1} parent=5 // pred_fallthru
        _
      %p332 = scmp.le.s32.totalorder 1, %s20
      %p333 = scmp.lt.s32.totalorder %s20, 4
      %p334 = pnand %p332, %p333
      %p335 = pneg %p334
      // Predicated region
      $region41: #{_fused_call.1} parent=5 // pred_check
        _
      $region42: #{_fused_call.1} parent=5 // pred_check_branch
        %337 = sbr.rel (%p334) target = $region44
      $region43: #{_fused_call.1} parent=5 // pred_region
        %s338 = ssub.s32 %s20, 1
        // Predicated region
        $region45: #{_fused_call.1} parent=43 // pred_check
          %p339 = pneg %p53
        $region46: #{_fused_call.1} parent=43 // pred_check_branch
          %341 = sbr.rel (%p339) target = $region48
        $region47: #{_fused_call.1} parent=43 // pred_region
          %343 = dma.done [#allocation4], 2048
        $region48: #{_fused_call.1} parent=43 // pred_fallthru
          _
        %s344 = sand.u32 %s25, 1
        %s345 = scalar_lea.sflag [#allocation7], %s344
        %s346 = sand.u32 %s66, 1
        %s347 = smul.addr %s346, 128
        %s348 = scalar_lea.vmem [#allocation6], %s347
        // Predicated region
        $region49: #{_fused_call.1} parent=43 // pred_check
          %p349 = pneg %p79
        $region50: #{_fused_call.1} parent=43 // pred_check_branch
          %351 = sbr.rel (%p349) target = $region52
        $region51: #{_fused_call.1} parent=43 // pred_region
          %353 = dma.done %s345, 2048
        $region52: #{_fused_call.1} parent=43 // pred_fallthru
          _
        %s354 = sand.u32 %s25, 1
        %s355 = scalar_lea.sflag [#allocation7], %s354
        %s356 = sand.u32 %s92, 1
        %s357 = scalar_lea.vmem [#allocation8], %s356
        // Predicated region
        $region53: #{_fused_call.1} parent=43 // pred_check
          %p358 = pneg %p105
        $region54: #{_fused_call.1} parent=43 // pred_check_branch
          %360 = sbr.rel (%p358) target = $region56
        $region55: #{_fused_call.1} parent=43 // pred_region
          %362 = dma.done %s355, 16
        $region56: #{_fused_call.1} parent=43 // pred_fallthru
          _
        %s363 = sand.u32 %s25, 1
        %s364 = scalar_lea.sflag [#allocation10], %s363
        %s365 = sand.u32 %s118, 1
        %s366 = scalar_lea.vmem [#allocation9], %s365
        // Predicated region
        $region57: #{_fused_call.1} parent=43 // pred_check
          %p367 = pneg %p131
        $region58: #{_fused_call.1} parent=43 // pred_check_branch
          %369 = sbr.rel (%p367) target = $region60
        $region59: #{_fused_call.1} parent=43 // pred_region
          %371 = dma.done %s364, 16
        $region60: #{_fused_call.1} parent=43 // pred_fallthru
          _
        %s372 = sand.u32 %s25, 1
        %s373 = scalar_lea.sflag [#allocation10], %s372
        %s374 = sand.u32 %s146, 1
        %s375 = smul.addr %s374, 128
        %s376 = scalar_lea.vmem [#allocation11], %s375
        // Predicated region
        $region61: #{_fused_call.1} parent=43 // pred_check
          %p377 = pneg %p159
        $region62: #{_fused_call.1} parent=43 // pred_check_branch
          %379 = sbr.rel (%p377) target = $region64
        $region63: #{_fused_call.1} parent=43 // pred_region
          %381 = dma.done %s373, 2048
        $region64: #{_fused_call.1} parent=43 // pred_fallthru
          _
        %p382 = pneg %p53
        %p383 = pneg %p50
        %s384 = sand.u32 %s25, 1
        %s385 = scalar_lea.sflag [#allocation7], %s384
        %s386 = sand.u32 %s66, 1
        %s387 = smul.addr %s386, 128
        %s388 = scalar_lea.vmem [#allocation6], %s387
        %p389 = pneg %p79
        %p390 = pneg %p76
        %s391 = sand.u32 %s25, 1
        %s392 = scalar_lea.sflag [#allocation7], %s391
        %s393 = sand.u32 %s92, 1
        %s394 = scalar_lea.vmem [#allocation8], %s393
        %p395 = pneg %p105
        %p396 = pneg %p102
        %s397 = sand.u32 %s25, 1
        %s398 = scalar_lea.sflag [#allocation10], %s397
        %s399 = sand.u32 %s118, 1
        %s400 = scalar_lea.vmem [#allocation9], %s399
        %p401 = pneg %p131
        %p402 = pneg %p128
        %s403 = sand.u32 %s25, 1
        %s404 = scalar_lea.sflag [#allocation10], %s403
        %s405 = sand.u32 %s146, 1
        %s406 = smul.addr %s405, 128
        %s407 = scalar_lea.vmem [#allocation11], %s406
        %p408 = pneg %p159
        %p409 = pneg %p156
        %s410 = smul.u32 2, %s29
        %p411 = scmp.lt.s32.totalorder %s410, 1
        %s412 = scalar_select %p411, %s410, 1
        %s413 = scalar_lea.vmem %s5, %s412
        %p414 = pneg %p185
        %p415 = pneg %p182
        %p416 = pneg %p211
        %p417 = pneg %p208
        %s418 = smul.u32 16, %s30
        %s419 = smul.u32 2, %s29
        %s420 = smul.u32 2, %s29
        %p421 = scmp.lt.s32.totalorder %s420, 1
        %s422 = scalar_select %p421, %s420, 1
        %s423 = scalar_lea.vmem %s5, %s422
        %s424 = smul.u32 2, %s29
        %s425 = smul.u32 2, %s29
        %p426 = scmp.eq.s32.totalorder %s30, 0
        // Predicated region
        $region65: #{_fused_call.1} parent=43 // pred_check
          %p427 = pneg %p426
        $region66: #{_fused_call.1} parent=43 // pred_check_branch
          %429 = sbr.rel (%p427) target = $region68
        $region67: #{_fused_call.1} parent=43 // pred_region
          %430 = vst [vmem:[#allocation2] sm:$0xff] 0.0
          %431 = vst [vmem:[#allocation2 + $0x8] sm:$0xff] 0.0
          %432 = vst [vmem:[#allocation2 + $0x10] sm:$0xff] 0.0
          %433 = vst [vmem:[#allocation2 + $0x18] sm:$0xff] 0.0
          %434 = vst [vmem:[#allocation2 + $0x20] sm:$0xff] 0.0
          %435 = vst [vmem:[#allocation2 + $0x28] sm:$0xff] 0.0
          %436 = vst [vmem:[#allocation2 + $0x30] sm:$0xff] 0.0
          %437 = vst [vmem:[#allocation2 + $0x38] sm:$0xff] 0.0
          %438 = vst [vmem:[#allocation2 + $0x40] sm:$0xff] 0.0
          %439 = vst [vmem:[#allocation2 + $0x48] sm:$0xff] 0.0
          %440 = vst [vmem:[#allocation2 + $0x50] sm:$0xff] 0.0
          %441 = vst [vmem:[#allocation2 + $0x58] sm:$0xff] 0.0
          %442 = vst [vmem:[#allocation2 + $0x60] sm:$0xff] 0.0
          %443 = vst [vmem:[#allocation2 + $0x68] sm:$0xff] 0.0
          %444 = vst [vmem:[#allocation2 + $0x70] sm:$0xff] 0.0
          %445 = vst [vmem:[#allocation2 + $0x78] sm:$0xff] 0.0
          %446 = vst [vmem:[#allocation2 + $0x80] sm:$0xff] 0.0
          %447 = vst [vmem:[#allocation2 + $0x88] sm:$0xff] 0.0
          %448 = vst [vmem:[#allocation2 + $0x90] sm:$0xff] 0.0
          %449 = vst [vmem:[#allocation2 + $0x98] sm:$0xff] 0.0
          %450 = vst [vmem:[#allocation2 + $0xa0] sm:$0xff] 0.0
          %451 = vst [vmem:[#allocation2 + $0xa8] sm:$0xff] 0.0
          %452 = vst [vmem:[#allocation2 + $0xb0] sm:$0xff] 0.0
          %453 = vst [vmem:[#allocation2 + $0xb8] sm:$0xff] 0.0
          %454 = vst [vmem:[#allocation2 + $0xc0] sm:$0xff] 0.0
          %455 = vst [vmem:[#allocation2 + $0xc8] sm:$0xff] 0.0
          %456 = vst [vmem:[#allocation2 + $0xd0] sm:$0xff] 0.0
          %457 = vst [vmem:[#allocation2 + $0xd8] sm:$0xff] 0.0
          %458 = vst [vmem:[#allocation2 + $0xe0] sm:$0xff] 0.0
          %459 = vst [vmem:[#allocation2 + $0xe8] sm:$0xff] 0.0
          %460 = vst [vmem:[#allocation2 + $0xf0] sm:$0xff] 0.0
          %461 = vst [vmem:[#allocation2 + $0xf8] sm:$0xff] 0.0
        $region68: #{_fused_call.1} parent=43 // pred_fallthru
          _
        %v462 = vld [vmem:[#allocation3] sm:$0xff]
        %v463 = vld [vmem:[#allocation3 + $0x8] sm:$0xff]
        %v464 = vld [vmem:[#allocation3 + $0x10] sm:$0xff]
        %v465 = vld [vmem:[#allocation3 + $0x18] sm:$0xff]
        %v466 = vld [vmem:[#allocation3 + $0x20] sm:$0xff]
        %v467 = vld [vmem:[#allocation3 + $0x28] sm:$0xff]
        %v468 = vld [vmem:[#allocation3 + $0x30] sm:$0xff]
        %v469 = vld [vmem:[#allocation3 + $0x38] sm:$0xff]
        %v470 = vld [vmem:[#allocation3 + $0x40] sm:$0xff]
        %v471 = vld [vmem:[#allocation3 + $0x48] sm:$0xff]
        %v472 = vld [vmem:[#allocation3 + $0x50] sm:$0xff]
        %v473 = vld [vmem:[#allocation3 + $0x58] sm:$0xff]
        %v474 = vld [vmem:[#allocation3 + $0x60] sm:$0xff]
        %v475 = vld [vmem:[#allocation3 + $0x68] sm:$0xff]
        %v476 = vld [vmem:[#allocation3 + $0x70] sm:$0xff]
        %v477 = vld [vmem:[#allocation3 + $0x78] sm:$0xff]
        %v478 = vld [vmem:[%s348] sm:$0xf]
        %v479 = vld [vmem:[%s348 + $0x4] sm:$0xf]
        %v480 = vld [vmem:[%s348 + $0x8] sm:$0xf]
        %v481 = vld [vmem:[%s348 + $0xc] sm:$0xf]
        %v482 = vld [vmem:[%s348 + $0x10] sm:$0xf]
        %v483 = vld [vmem:[%s348 + $0x14] sm:$0xf]
        %v484 = vld [vmem:[%s348 + $0x18] sm:$0xf]
        %v485 = vld [vmem:[%s348 + $0x1c] sm:$0xf]
        %v486 = vld [vmem:[%s348 + $0x20] sm:$0xf]
        %v487 = vld [vmem:[%s348 + $0x24] sm:$0xf]
        %v488 = vld [vmem:[%s348 + $0x28] sm:$0xf]
        %v489 = vld [vmem:[%s348 + $0x2c] sm:$0xf]
        %v490 = vld [vmem:[%s348 + $0x30] sm:$0xf]
        %v491 = vld [vmem:[%s348 + $0x34] sm:$0xf]
        %v492 = vld [vmem:[%s348 + $0x38] sm:$0xf]
        %v493 = vld [vmem:[%s348 + $0x3c] sm:$0xf]
        %v494 = vld [vmem:[%s348 + $0x40] sm:$0xf]
        %v495 = vld [vmem:[%s348 + $0x44] sm:$0xf]
        %v496 = vld [vmem:[%s348 + $0x48] sm:$0xf]
        %v497 = vld [vmem:[%s348 + $0x4c] sm:$0xf]
        %v498 = vld [vmem:[%s348 + $0x50] sm:$0xf]
        %v499 = vld [vmem:[%s348 + $0x54] sm:$0xf]
        %v500 = vld [vmem:[%s348 + $0x58] sm:$0xf]
        %v501 = vld [vmem:[%s348 + $0x5c] sm:$0xf]
        %v502 = vld [vmem:[%s348 + $0x60] sm:$0xf]
        %v503 = vld [vmem:[%s348 + $0x64] sm:$0xf]
        %v504 = vld [vmem:[%s348 + $0x68] sm:$0xf]
        %v505 = vld [vmem:[%s348 + $0x6c] sm:$0xf]
        %v506 = vld [vmem:[%s348 + $0x70] sm:$0xf]
        %v507 = vld [vmem:[%s348 + $0x74] sm:$0xf]
        %v508 = vld [vmem:[%s348 + $0x78] sm:$0xf]
        %v509 = vld [vmem:[%s348 + $0x7c] sm:$0xf]
        %v526 = vunpack.c.l.b16 %v462
        %v527 = vunpack.c.h.b16 %v462
        %v528 = vunpack.c.l.b16 %v463
        %v529 = vunpack.c.h.b16 %v463
        %v530 = vunpack.c.l.b16 %v464
        %v531 = vunpack.c.h.b16 %v464
        %v532 = vunpack.c.l.b16 %v465
        %v533 = vunpack.c.h.b16 %v465
        %v534 = vunpack.c.l.b16 %v466
        %v535 = vunpack.c.h.b16 %v466
        %v536 = vunpack.c.l.b16 %v467
        %v537 = vunpack.c.h.b16 %v467
        %v538 = vunpack.c.l.b16 %v468
        %v539 = vunpack.c.h.b16 %v468
        %v540 = vunpack.c.l.b16 %v469
        %v541 = vunpack.c.h.b16 %v469
        %v542 = vunpack.c.l.b16 %v470
        %v543 = vunpack.c.h.b16 %v470
        %v544 = vunpack.c.l.b16 %v471
        %v545 = vunpack.c.h.b16 %v471
        %v546 = vunpack.c.l.b16 %v472
        %v547 = vunpack.c.h.b16 %v472
        %v548 = vunpack.c.l.b16 %v473
        %v549 = vunpack.c.h.b16 %v473
        %v550 = vunpack.c.l.b16 %v474
        %v551 = vunpack.c.h.b16 %v474
        %v552 = vunpack.c.l.b16 %v475
        %v553 = vunpack.c.h.b16 %v475
        %v554 = vunpack.c.l.b16 %v476
        %v555 = vunpack.c.h.b16 %v476
        %v556 = vunpack.c.l.b16 %v477
        %v557 = vunpack.c.h.b16 %v477
        %v558 = vpack.c.b16 %v528, %v526
        %v559 = vpack.c.b16 %v529, %v527
        %v560 = vpack.c.b16 %v532, %v530
        %v561 = vpack.c.b16 %v533, %v531
        %v562 = vpack.c.b16 %v536, %v534
        %v563 = vpack.c.b16 %v537, %v535
        %v564 = vpack.c.b16 %v540, %v538
        %v565 = vpack.c.b16 %v541, %v539
        %v566 = vpack.c.b16 %v544, %v542
        %v567 = vpack.c.b16 %v545, %v543
        %v568 = vpack.c.b16 %v548, %v546
        %v569 = vpack.c.b16 %v549, %v547
        %v570 = vpack.c.b16 %v552, %v550
        %v571 = vpack.c.b16 %v553, %v551
        %v572 = vpack.c.b16 %v556, %v554
        %v573 = vpack.c.b16 %v557, %v555
        %v622 = vunpack.c.l.b16 %v478
        %v623 = vunpack.c.l.b16 %v479
        %v624 = vunpack.c.l.b16 %v480
        %v625 = vunpack.c.l.b16 %v481
        %v626 = vunpack.c.l.b16 %v482
        %v627 = vunpack.c.l.b16 %v483
        %v628 = vunpack.c.l.b16 %v484
        %v629 = vunpack.c.l.b16 %v485
        %v630 = vunpack.c.l.b16 %v486
        %v631 = vunpack.c.l.b16 %v487
        %v632 = vunpack.c.l.b16 %v488
        %v633 = vunpack.c.l.b16 %v489
        %v634 = vunpack.c.l.b16 %v490
        %v635 = vunpack.c.l.b16 %v491
        %v636 = vunpack.c.l.b16 %v492
        %v637 = vunpack.c.l.b16 %v493
        %v638 = vunpack.c.l.b16 %v494
        %v639 = vunpack.c.l.b16 %v495
        %v640 = vunpack.c.l.b16 %v496
        %v641 = vunpack.c.l.b16 %v497
        %v642 = vunpack.c.l.b16 %v498
        %v643 = vunpack.c.l.b16 %v499
        %v644 = vunpack.c.l.b16 %v500
        %v645 = vunpack.c.l.b16 %v501
        %v646 = vunpack.c.l.b16 %v502
        %v647 = vunpack.c.l.b16 %v503
        %v648 = vunpack.c.l.b16 %v504
        %v649 = vunpack.c.l.b16 %v505
        %v650 = vunpack.c.l.b16 %v506
        %v651 = vunpack.c.l.b16 %v507
        %v652 = vunpack.c.l.b16 %v508
        %v653 = vunpack.c.l.b16 %v509
        %v654 = vpack.c.b16 %v623, %v622
        %v655 = vpack.c.b16 %v625, %v624
        %v656 = vpack.c.b16 %v627, %v626
        %v657 = vpack.c.b16 %v629, %v628
        %v658 = vpack.c.b16 %v631, %v630
        %v659 = vpack.c.b16 %v633, %v632
        %v660 = vpack.c.b16 %v635, %v634
        %v661 = vpack.c.b16 %v637, %v636
        %v662 = vpack.c.b16 %v639, %v638
        %v663 = vpack.c.b16 %v641, %v640
        %v664 = vpack.c.b16 %v643, %v642
        %v665 = vpack.c.b16 %v645, %v644
        %v666 = vpack.c.b16 %v647, %v646
        %v667 = vpack.c.b16 %v649, %v648
        %v668 = vpack.c.b16 %v651, %v650
        %v669 = vpack.c.b16 %v653, %v652
        %686 = vmatpush.bf16.msra.mxu0 %v661
        %687 = vmatpush.bf16.msra.mxu0 %v660
        %688 = vmatpush.bf16.msra.mxu0 %v659
        %689 = vmatpush.bf16.msra.mxu0 %v658
        %690 = vmatpush.bf16.msra.mxu0 %v657
        %691 = vmatpush.bf16.msra.mxu0 %v656
        %692 = vmatpush.bf16.msra.mxu0 %v655
        %693 = vmatpush.bf16.msra.mxu0 %v654
        %694 = vmatmul.bf16.gmra.mxu0 %v558
        %v695 = vpop.f32.mrf.mxu0
        %v696 = vadd.f32 0.0, %v695
        %v697 = vpop.f32.mrf.mxu0
        %v698 = vadd.f32 0.0, %v697
        %699 = vmatmul.bf16.gmra.mxu0 %v560
        %v700 = vpop.f32.mrf.mxu0
        %v701 = vadd.f32 0.0, %v700
        %v702 = vpop.f32.mrf.mxu0
        %v703 = vadd.f32 0.0, %v702
        %704 = vmatmul.bf16.gmra.mxu0 %v562
        %v705 = vpop.f32.mrf.mxu0
        %v706 = vadd.f32 0.0, %v705
        %v707 = vpop.f32.mrf.mxu0
        %v708 = vadd.f32 0.0, %v707
        %709 = vmatmul.bf16.gmra.mxu0 %v564
        %v710 = vpop.f32.mrf.mxu0
        %v711 = vadd.f32 0.0, %v710
        %v712 = vpop.f32.mrf.mxu0
        %v713 = vadd.f32 0.0, %v712
        %714 = vmatmul.bf16.gmra.mxu0 %v566
        %v715 = vpop.f32.mrf.mxu0
        %v716 = vadd.f32 0.0, %v715
        %v717 = vpop.f32.mrf.mxu0
        %v718 = vadd.f32 0.0, %v717
        %719 = vmatmul.bf16.gmra.mxu0 %v568
        %v720 = vpop.f32.mrf.mxu0
        %v721 = vadd.f32 0.0, %v720
        %v722 = vpop.f32.mrf.mxu0
        %v723 = vadd.f32 0.0, %v722
        %724 = vmatmul.bf16.gmra.mxu0 %v570
        %v725 = vpop.f32.mrf.mxu0
        %v726 = vadd.f32 0.0, %v725
        %v727 = vpop.f32.mrf.mxu0
        %v728 = vadd.f32 0.0, %v727
        %729 = vmatmul.bf16.gmra.mxu0 %v572
        %v730 = vpop.f32.mrf.mxu0
        %v731 = vadd.f32 0.0, %v730
        %v732 = vpop.f32.mrf.mxu0
        %v733 = vadd.f32 0.0, %v732
        %734 = vdwg.mxu0
        %735 = vmatpush.bf16.msra.mxu0 %v669
        %736 = vmatpush.bf16.msra.mxu0 %v668
        %737 = vmatpush.bf16.msra.mxu0 %v667
        %738 = vmatpush.bf16.msra.mxu0 %v666
        %739 = vmatpush.bf16.msra.mxu0 %v665
        %740 = vmatpush.bf16.msra.mxu0 %v664
        %741 = vmatpush.bf16.msra.mxu0 %v663
        %742 = vmatpush.bf16.msra.mxu0 %v662
        %743 = vmatmul.bf16.gmra.mxu0 %v559
        %v744 = vpop.f32.mrf.mxu0
        %v745 = vadd.f32 %v696, %v744
        %v746 = vpop.f32.mrf.mxu0
        %v747 = vadd.f32 %v698, %v746
        %748 = vmatmul.bf16.gmra.mxu0 %v561
        %v749 = vpop.f32.mrf.mxu0
        %v750 = vadd.f32 %v701, %v749
        %v751 = vpop.f32.mrf.mxu0
        %v752 = vadd.f32 %v703, %v751
        %753 = vmatmul.bf16.gmra.mxu0 %v563
        %v754 = vpop.f32.mrf.mxu0
        %v755 = vadd.f32 %v706, %v754
        %v756 = vpop.f32.mrf.mxu0
        %v757 = vadd.f32 %v708, %v756
        %758 = vmatmul.bf16.gmra.mxu0 %v565
        %v759 = vpop.f32.mrf.mxu0
        %v760 = vadd.f32 %v711, %v759
        %v761 = vpop.f32.mrf.mxu0
        %v762 = vadd.f32 %v713, %v761
        %763 = vmatmul.bf16.gmra.mxu0 %v567
        %v764 = vpop.f32.mrf.mxu0
        %v765 = vadd.f32 %v716, %v764
        %v766 = vpop.f32.mrf.mxu0
        %v767 = vadd.f32 %v718, %v766
        %768 = vmatmul.bf16.gmra.mxu0 %v569
        %v769 = vpop.f32.mrf.mxu0
        %v770 = vadd.f32 %v721, %v769
        %v771 = vpop.f32.mrf.mxu0
        %v772 = vadd.f32 %v723, %v771
        %773 = vmatmul.bf16.gmra.mxu0 %v571
        %v774 = vpop.f32.mrf.mxu0
        %v775 = vadd.f32 %v726, %v774
        %v776 = vpop.f32.mrf.mxu0
        %v777 = vadd.f32 %v728, %v776
        %778 = vmatmul.bf16.gmra.mxu0 %v573
        %v779 = vpop.f32.mrf.mxu0
        %v780 = vadd.f32 %v731, %v779
        %v781 = vpop.f32.mrf.mxu0
        %v782 = vadd.f32 %v733, %v781
        %783 = vdwg.mxu0
        %v784 = vtanh.pop %v745
        %v785 = vtanh.pop %v747
        %v786 = vtanh.pop %v750
        %v787 = vtanh.pop %v752
        %v788 = vtanh.pop %v755
        %v789 = vtanh.pop %v757
        %v790 = vtanh.pop %v760
        %v791 = vtanh.pop %v762
        %v792 = vtanh.pop %v765
        %v793 = vtanh.pop %v767
        %v794 = vtanh.pop %v770
        %v795 = vtanh.pop %v772
        %v796 = vtanh.pop %v775
        %v797 = vtanh.pop %v777
        %v798 = vtanh.pop %v780
        %v799 = vtanh.pop %v782
        %v800 = vadd.f32 %v784, %v785
        %v801 = vadd.f32 %v800, %v786
        %v802 = vadd.f32 %v801, %v787
        %v803 = vadd.f32 %v802, %v788
        %v804 = vadd.f32 %v803, %v789
        %v805 = vadd.f32 %v804, %v790
        %v806 = vadd.f32 %v805, %v791
        %v807 = vadd.f32 %v806, %v792
        %v808 = vadd.f32 %v807, %v793
        %v809 = vadd.f32 %v808, %v794
        %v810 = vadd.f32 %v809, %v795
        %v811 = vadd.f32 %v810, %v796
        %v812 = vadd.f32 %v811, %v797
        %v813 = vadd.f32 %v812, %v798
        %v814 = vadd.f32 %v813, %v799
        %v815 = vrot.slane %v814, 4
        %v816 = vadd.f32 %v814, %v815
        %v817 = vrot.slane %v816, 2
        %v818 = vadd.f32 %v816, %v817
        %v819 = vrot.slane %v818, 1
        %v820 = vadd.f32 %v818, %v819
        %v821 = vrcp.pop 128.0
        %v822 = vmul.f32 128.0, %v821
        %v823 = vsub.f32 1.0, %v822
        %v824 = vmul.f32 %v821, %v823
        %v825 = vadd.f32 %v821, %v824
        %vm826 = vweird.f32 %v821
        %v827 = vsel %vm826, %v821, %v825
        %v828 = vmul.f32 %v820, %v827
        %v829 = vmul.f32 %v784, %v784
        %v830 = vmul.f32 %v785, %v785
        %v831 = vmul.f32 %v786, %v786
        %v832 = vmul.f32 %v787, %v787
        %v833 = vmul.f32 %v788, %v788
        %v834 = vmul.f32 %v789, %v789
        %v835 = vmul.f32 %v790, %v790
        %v836 = vmul.f32 %v791, %v791
        %v837 = vmul.f32 %v792, %v792
        %v838 = vmul.f32 %v793, %v793
        %v839 = vmul.f32 %v794, %v794
        %v840 = vmul.f32 %v795, %v795
        %v841 = vmul.f32 %v796, %v796
        %v842 = vmul.f32 %v797, %v797
        %v843 = vmul.f32 %v798, %v798
        %v844 = vmul.f32 %v799, %v799
        %v845 = vadd.f32 %v829, %v830
        %v846 = vadd.f32 %v845, %v831
        %v847 = vadd.f32 %v846, %v832
        %v848 = vadd.f32 %v847, %v833
        %v849 = vadd.f32 %v848, %v834
        %v850 = vadd.f32 %v849, %v835
        %v851 = vadd.f32 %v850, %v836
        %v852 = vadd.f32 %v851, %v837
        %v853 = vadd.f32 %v852, %v838
        %v854 = vadd.f32 %v853, %v839
        %v855 = vadd.f32 %v854, %v840
        %v856 = vadd.f32 %v855, %v841
        %v857 = vadd.f32 %v856, %v842
        %v858 = vadd.f32 %v857, %v843
        %v859 = vadd.f32 %v858, %v844
        %v860 = vrot.slane %v859, 4
        %v861 = vadd.f32 %v859, %v860
        %v862 = vrot.slane %v861, 2
        %v863 = vadd.f32 %v861, %v862
        %v864 = vrot.slane %v863, 1
        %v865 = vadd.f32 %v863, %v864
        %v866 = vmul.f32 %v865, %v827
        %v867 = vmul.f32 %v828, %v828
        %v868 = vsub.f32 %v866, %v867
        %v869 = vld [vmem:[%s357] sm:$0x1]
        %v870 = vadd.f32 %v868, 1e-05
        %v871 = vrsqrt.pop %v870
        %v872 = vmul.f32 %v871, %v870
        %v873 = vmul.f32 %v872, %v871
        %v874 = vmul.f32 0.5, %v873
        %v875 = vsub.f32 1.5, %v874
        %v876 = vmul.f32 %v871, %v875
        %vm877 = vweird.f32 %v870
        %vm878 = vweird.f32 %v871
        %vm879 = vmor %vm877, %vm878
        %v880 = vsel %vm879, %v871, %v876
        %v881 = vmul.f32 %v869, %v880
        %v882 = vld [vmem:[%s366] sm:$0x1]
        %v883 = vmul.f32 %v828, %v881
        %v884 = vsub.f32 %v882, %v883
        %v886 = vperm.slane %v881, 0
        %v888 = vmul.f32 %v784, %v886
        %v889 = vmul.f32 %v785, %v886
        %v890 = vmul.f32 %v786, %v886
        %v891 = vmul.f32 %v787, %v886
        %v892 = vmul.f32 %v788, %v886
        %v893 = vmul.f32 %v789, %v886
        %v894 = vmul.f32 %v790, %v886
        %v895 = vmul.f32 %v791, %v886
        %v896 = vmul.f32 %v792, %v886
        %v897 = vmul.f32 %v793, %v886
        %v898 = vmul.f32 %v794, %v886
        %v899 = vmul.f32 %v795, %v886
        %v900 = vmul.f32 %v796, %v886
        %v901 = vmul.f32 %v797, %v886
        %v902 = vmul.f32 %v798, %v886
        %v903 = vmul.f32 %v799, %v886
        %v905 = vperm.slane %v884, 0
        %v907 = vadd.f32 %v888, %v905
        %v908 = vadd.f32 %v889, %v905
        %v909 = vadd.f32 %v890, %v905
        %v910 = vadd.f32 %v891, %v905
        %v911 = vadd.f32 %v892, %v905
        %v912 = vadd.f32 %v893, %v905
        %v913 = vadd.f32 %v894, %v905
        %v914 = vadd.f32 %v895, %v905
        %v915 = vadd.f32 %v896, %v905
        %v916 = vadd.f32 %v897, %v905
        %v917 = vadd.f32 %v898, %v905
        %v918 = vadd.f32 %v899, %v905
        %v919 = vadd.f32 %v900, %v905
        %v920 = vadd.f32 %v901, %v905
        %v921 = vadd.f32 %v902, %v905
        %v922 = vadd.f32 %v903, %v905
        %v923 = vmax.f32 %v907, 0.0
        %v924 = vmax.f32 %v908, 0.0
        %v925 = vmax.f32 %v909, 0.0
        %v926 = vmax.f32 %v910, 0.0
        %v927 = vmax.f32 %v911, 0.0
        %v928 = vmax.f32 %v912, 0.0
        %v929 = vmax.f32 %v913, 0.0
        %v930 = vmax.f32 %v914, 0.0
        %v931 = vmax.f32 %v915, 0.0
        %v932 = vmax.f32 %v916, 0.0
        %v933 = vmax.f32 %v917, 0.0
        %v934 = vmax.f32 %v918, 0.0
        %v935 = vmax.f32 %v919, 0.0
        %v936 = vmax.f32 %v920, 0.0
        %v937 = vmax.f32 %v921, 0.0
        %v938 = vmax.f32 %v922, 0.0
        %v939 = vld [vmem:[#allocation2] sm:$0xff]
        %v940 = vld [vmem:[#allocation2 + $0x8] sm:$0xff]
        %v941 = vld [vmem:[#allocation2 + $0x10] sm:$0xff]
        %v942 = vld [vmem:[#allocation2 + $0x18] sm:$0xff]
        %v943 = vld [vmem:[#allocation2 + $0x20] sm:$0xff]
        %v944 = vld [vmem:[#allocation2 + $0x28] sm:$0xff]
        %v945 = vld [vmem:[#allocation2 + $0x30] sm:$0xff]
        %v946 = vld [vmem:[#allocation2 + $0x38] sm:$0xff]
        %v947 = vld [vmem:[#allocation2 + $0x40] sm:$0xff]
        %v948 = vld [vmem:[#allocation2 + $0x48] sm:$0xff]
        %v949 = vld [vmem:[#allocation2 + $0x50] sm:$0xff]
        %v950 = vld [vmem:[#allocation2 + $0x58] sm:$0xff]
        %v951 = vld [vmem:[#allocation2 + $0x60] sm:$0xff]
        %v952 = vld [vmem:[#allocation2 + $0x68] sm:$0xff]
        %v953 = vld [vmem:[#allocation2 + $0x70] sm:$0xff]
        %v954 = vld [vmem:[#allocation2 + $0x78] sm:$0xff]
        %v955 = vld [vmem:[#allocation2 + $0x80] sm:$0xff]
        %v956 = vld [vmem:[#allocation2 + $0x88] sm:$0xff]
        %v957 = vld [vmem:[#allocation2 + $0x90] sm:$0xff]
        %v958 = vld [vmem:[#allocation2 + $0x98] sm:$0xff]
        %v959 = vld [vmem:[#allocation2 + $0xa0] sm:$0xff]
        %v960 = vld [vmem:[#allocation2 + $0xa8] sm:$0xff]
        %v961 = vld [vmem:[#allocation2 + $0xb0] sm:$0xff]
        %v962 = vld [vmem:[#allocation2 + $0xb8] sm:$0xff]
        %v963 = vld [vmem:[#allocation2 + $0xc0] sm:$0xff]
        %v964 = vld [vmem:[#allocation2 + $0xc8] sm:$0xff]
        %v965 = vld [vmem:[#allocation2 + $0xd0] sm:$0xff]
        %v966 = vld [vmem:[#allocation2 + $0xd8] sm:$0xff]
        %v967 = vld [vmem:[#allocation2 + $0xe0] sm:$0xff]
        %v968 = vld [vmem:[#allocation2 + $0xe8] sm:$0xff]
        %v969 = vld [vmem:[#allocation2 + $0xf0] sm:$0xff]
        %v970 = vld [vmem:[#allocation2 + $0xf8] sm:$0xff]
        %v971 = vpack.c.bf16 %v924, %v923
        %v972 = vpack.c.bf16 %v926, %v925
        %v973 = vpack.c.bf16 %v928, %v927
        %v974 = vpack.c.bf16 %v930, %v929
        %v975 = vpack.c.bf16 %v932, %v931
        %v976 = vpack.c.bf16 %v934, %v933
        %v977 = vpack.c.bf16 %v936, %v935
        %v978 = vpack.c.bf16 %v938, %v937
        %v979 = vld [vmem:[%s376] sm:$0xff]
        %v980 = vld [vmem:[%s376 + $0x8] sm:$0xff]
        %v981 = vld [vmem:[%s376 + $0x10] sm:$0xff]
        %v982 = vld [vmem:[%s376 + $0x18] sm:$0xff]
        %v983 = vld [vmem:[%s376 + $0x20] sm:$0xff]
        %v984 = vld [vmem:[%s376 + $0x28] sm:$0xff]
        %v985 = vld [vmem:[%s376 + $0x30] sm:$0xff]
        %v986 = vld [vmem:[%s376 + $0x38] sm:$0xff]
        %v987 = vld [vmem:[%s376 + $0x40] sm:$0xff]
        %v988 = vld [vmem:[%s376 + $0x48] sm:$0xff]
        %v989 = vld [vmem:[%s376 + $0x50] sm:$0xff]
        %v990 = vld [vmem:[%s376 + $0x58] sm:$0xff]
        %v991 = vld [vmem:[%s376 + $0x60] sm:$0xff]
        %v992 = vld [vmem:[%s376 + $0x68] sm:$0xff]
        %v993 = vld [vmem:[%s376 + $0x70] sm:$0xff]
        %v994 = vld [vmem:[%s376 + $0x78] sm:$0xff]
        %v1011 = vunpack.c.l.b16 %v979
        %v1012 = vunpack.c.h.b16 %v979
        %v1013 = vunpack.c.l.b16 %v980
        %v1014 = vunpack.c.h.b16 %v980
        %v1015 = vunpack.c.l.b16 %v981
        %v1016 = vunpack.c.h.b16 %v981
        %v1017 = vunpack.c.l.b16 %v982
        %v1018 = vunpack.c.h.b16 %v982
        %v1019 = vunpack.c.l.b16 %v983
        %v1020 = vunpack.c.h.b16 %v983
        %v1021 = vunpack.c.l.b16 %v984
        %v1022 = vunpack.c.h.b16 %v984
        %v1023 = vunpack.c.l.b16 %v985
        %v1024 = vunpack.c.h.b16 %v985
        %v1025 = vunpack.c.l.b16 %v986
        %v1026 = vunpack.c.h.b16 %v986
        %v1027 = vunpack.c.l.b16 %v987
        %v1028 = vunpack.c.h.b16 %v987
        %v1029 = vunpack.c.l.b16 %v988
        %v1030 = vunpack.c.h.b16 %v988
        %v1031 = vunpack.c.l.b16 %v989
        %v1032 = vunpack.c.h.b16 %v989
        %v1033 = vunpack.c.l.b16 %v990
        %v1034 = vunpack.c.h.b16 %v990
        %v1035 = vunpack.c.l.b16 %v991
        %v1036 = vunpack.c.h.b16 %v991
        %v1037 = vunpack.c.l.b16 %v992
        %v1038 = vunpack.c.h.b16 %v992
        %v1039 = vunpack.c.l.b16 %v993
        %v1040 = vunpack.c.h.b16 %v993
        %v1041 = vunpack.c.l.b16 %v994
        %v1042 = vunpack.c.h.b16 %v994
        %v1043 = vpack.c.b16 %v1013, %v1011
        %v1044 = vpack.c.b16 %v1014, %v1012
        %v1045 = vpack.c.b16 %v1017, %v1015
        %v1046 = vpack.c.b16 %v1018, %v1016
        %v1047 = vpack.c.b16 %v1021, %v1019
        %v1048 = vpack.c.b16 %v1022, %v1020
        %v1049 = vpack.c.b16 %v1025, %v1023
        %v1050 = vpack.c.b16 %v1026, %v1024
        %v1051 = vpack.c.b16 %v1029, %v1027
        %v1052 = vpack.c.b16 %v1030, %v1028
        %v1053 = vpack.c.b16 %v1033, %v1031
        %v1054 = vpack.c.b16 %v1034, %v1032
        %v1055 = vpack.c.b16 %v1037, %v1035
        %v1056 = vpack.c.b16 %v1038, %v1036
        %v1057 = vpack.c.b16 %v1041, %v1039
        %v1058 = vpack.c.b16 %v1042, %v1040
        %1075 = vmatpush.bf16.msra.mxu0 %v1057
        %1076 = vmatpush.bf16.msra.mxu0 %v1055
        %1077 = vmatpush.bf16.msra.mxu0 %v1053
        %1078 = vmatpush.bf16.msra.mxu0 %v1051
        %1079 = vmatpush.bf16.msra.mxu0 %v1049
        %1080 = vmatpush.bf16.msra.mxu0 %v1047
        %1081 = vmatpush.bf16.msra.mxu0 %v1045
        %1082 = vmatpush.bf16.msra.mxu0 %v1043
        %1083 = vmatmul.bf16.gmra.mxu0 %v971
        %v1084 = vpop.f32.mrf.mxu0
        %v1085 = vadd.f32 0.0, %v1084
        %v1086 = vpop.f32.mrf.mxu0
        %v1087 = vadd.f32 0.0, %v1086
        %1088 = vmatmul.bf16.gmra.mxu0 %v972
        %v1089 = vpop.f32.mrf.mxu0
        %v1090 = vadd.f32 0.0, %v1089
        %v1091 = vpop.f32.mrf.mxu0
        %v1092 = vadd.f32 0.0, %v1091
        %1093 = vmatmul.bf16.gmra.mxu0 %v973
        %v1094 = vpop.f32.mrf.mxu0
        %v1095 = vadd.f32 0.0, %v1094
        %v1096 = vpop.f32.mrf.mxu0
        %v1097 = vadd.f32 0.0, %v1096
        %1098 = vmatmul.bf16.gmra.mxu0 %v974
        %v1099 = vpop.f32.mrf.mxu0
        %v1100 = vadd.f32 0.0, %v1099
        %v1101 = vpop.f32.mrf.mxu0
        %v1102 = vadd.f32 0.0, %v1101
        %1103 = vmatmul.bf16.gmra.mxu0 %v975
        %v1104 = vpop.f32.mrf.mxu0
        %v1105 = vadd.f32 0.0, %v1104
        %v1106 = vpop.f32.mrf.mxu0
        %v1107 = vadd.f32 0.0, %v1106
        %1108 = vmatmul.bf16.gmra.mxu0 %v976
        %v1109 = vpop.f32.mrf.mxu0
        %v1110 = vadd.f32 0.0, %v1109
        %v1111 = vpop.f32.mrf.mxu0
        %v1112 = vadd.f32 0.0, %v1111
        %1113 = vmatmul.bf16.gmra.mxu0 %v977
        %v1114 = vpop.f32.mrf.mxu0
        %v1115 = vadd.f32 0.0, %v1114
        %v1116 = vpop.f32.mrf.mxu0
        %v1117 = vadd.f32 0.0, %v1116
        %1118 = vmatmul.bf16.gmra.mxu0 %v978
        %v1119 = vpop.f32.mrf.mxu0
        %v1120 = vadd.f32 0.0, %v1119
        %v1121 = vpop.f32.mrf.mxu0
        %v1122 = vadd.f32 0.0, %v1121
        %1123 = vdwg.mxu0
        %1124 = vmatpush.bf16.msra.mxu0 %v1058
        %1125 = vmatpush.bf16.msra.mxu0 %v1056
        %1126 = vmatpush.bf16.msra.mxu0 %v1054
        %1127 = vmatpush.bf16.msra.mxu0 %v1052
        %1128 = vmatpush.bf16.msra.mxu0 %v1050
        %1129 = vmatpush.bf16.msra.mxu0 %v1048
        %1130 = vmatpush.bf16.msra.mxu0 %v1046
        %1131 = vmatpush.bf16.msra.mxu0 %v1044
        %1132 = vmatmul.bf16.gmra.mxu0 %v971
        %v1133 = vpop.f32.mrf.mxu0
        %v1134 = vadd.f32 0.0, %v1133
        %v1135 = vpop.f32.mrf.mxu0
        %v1136 = vadd.f32 0.0, %v1135
        %1137 = vmatmul.bf16.gmra.mxu0 %v972
        %v1138 = vpop.f32.mrf.mxu0
        %v1139 = vadd.f32 0.0, %v1138
        %v1140 = vpop.f32.mrf.mxu0
        %v1141 = vadd.f32 0.0, %v1140
        %1142 = vmatmul.bf16.gmra.mxu0 %v973
        %v1143 = vpop.f32.mrf.mxu0
        %v1144 = vadd.f32 0.0, %v1143
        %v1145 = vpop.f32.mrf.mxu0
        %v1146 = vadd.f32 0.0, %v1145
        %1147 = vmatmul.bf16.gmra.mxu0 %v974
        %v1148 = vpop.f32.mrf.mxu0
        %v1149 = vadd.f32 0.0, %v1148
        %v1150 = vpop.f32.mrf.mxu0
        %v1151 = vadd.f32 0.0, %v1150
        %1152 = vmatmul.bf16.gmra.mxu0 %v975
        %v1153 = vpop.f32.mrf.mxu0
        %v1154 = vadd.f32 0.0, %v1153
        %v1155 = vpop.f32.mrf.mxu0
        %v1156 = vadd.f32 0.0, %v1155
        %1157 = vmatmul.bf16.gmra.mxu0 %v976
        %v1158 = vpop.f32.mrf.mxu0
        %v1159 = vadd.f32 0.0, %v1158
        %v1160 = vpop.f32.mrf.mxu0
        %v1161 = vadd.f32 0.0, %v1160
        %1162 = vmatmul.bf16.gmra.mxu0 %v977
        %v1163 = vpop.f32.mrf.mxu0
        %v1164 = vadd.f32 0.0, %v1163
        %v1165 = vpop.f32.mrf.mxu0
        %v1166 = vadd.f32 0.0, %v1165
        %1167 = vmatmul.bf16.gmra.mxu0 %v978
        %v1168 = vpop.f32.mrf.mxu0
        %v1169 = vadd.f32 0.0, %v1168
        %v1170 = vpop.f32.mrf.mxu0
        %v1171 = vadd.f32 0.0, %v1170
        %1172 = vdwg.mxu0
        %v1173 = vadd.f32 %v939, %v1085
        %v1174 = vadd.f32 %v940, %v1134
        %v1175 = vadd.f32 %v941, %v1087
        %v1176 = vadd.f32 %v942, %v1136
        %v1177 = vadd.f32 %v943, %v1090
        %v1178 = vadd.f32 %v944, %v1139
        %v1179 = vadd.f32 %v945, %v1092
        %v1180 = vadd.f32 %v946, %v1141
        %v1181 = vadd.f32 %v947, %v1095
        %v1182 = vadd.f32 %v948, %v1144
        %v1183 = vadd.f32 %v949, %v1097
        %v1184 = vadd.f32 %v950, %v1146
        %v1185 = vadd.f32 %v951, %v1100
        %v1186 = vadd.f32 %v952, %v1149
        %v1187 = vadd.f32 %v953, %v1102
        %v1188 = vadd.f32 %v954, %v1151
        %v1189 = vadd.f32 %v955, %v1105
        %v1190 = vadd.f32 %v956, %v1154
        %v1191 = vadd.f32 %v957, %v1107
        %v1192 = vadd.f32 %v958, %v1156
        %v1193 = vadd.f32 %v959, %v1110
        %v1194 = vadd.f32 %v960, %v1159
        %v1195 = vadd.f32 %v961, %v1112
        %v1196 = vadd.f32 %v962, %v1161
        %v1197 = vadd.f32 %v963, %v1115
        %v1198 = vadd.f32 %v964, %v1164
        %v1199 = vadd.f32 %v965, %v1117
        %v1200 = vadd.f32 %v966, %v1166
        %v1201 = vadd.f32 %v967, %v1120
        %v1202 = vadd.f32 %v968, %v1169
        %v1203 = vadd.f32 %v969, %v1122
        %v1204 = vadd.f32 %v970, %v1171
        %1205 = vst [vmem:[#allocation2] sm:$0xff] %v1173
        %1206 = vst [vmem:[#allocation2 + $0x8] sm:$0xff] %v1174
        %1207 = vst [vmem:[#allocation2 + $0x10] sm:$0xff] %v1175
        %1208 = vst [vmem:[#allocation2 + $0x18] sm:$0xff] %v1176
        %1209 = vst [vmem:[#allocation2 + $0x20] sm:$0xff] %v1177
        %1210 = vst [vmem:[#allocation2 + $0x28] sm:$0xff] %v1178
        %1211 = vst [vmem:[#allocation2 + $0x30] sm:$0xff] %v1179
        %1212 = vst [vmem:[#allocation2 + $0x38] sm:$0xff] %v1180
        %1213 = vst [vmem:[#allocation2 + $0x40] sm:$0xff] %v1181
        %1214 = vst [vmem:[#allocation2 + $0x48] sm:$0xff] %v1182
        %1215 = vst [vmem:[#allocation2 + $0x50] sm:$0xff] %v1183
        %1216 = vst [vmem:[#allocation2 + $0x58] sm:$0xff] %v1184
        %1217 = vst [vmem:[#allocation2 + $0x60] sm:$0xff] %v1185
        %1218 = vst [vmem:[#allocation2 + $0x68] sm:$0xff] %v1186
        %1219 = vst [vmem:[#allocation2 + $0x70] sm:$0xff] %v1187
        %1220 = vst [vmem:[#allocation2 + $0x78] sm:$0xff] %v1188
        %1221 = vst [vmem:[#allocation2 + $0x80] sm:$0xff] %v1189
        %1222 = vst [vmem:[#allocation2 + $0x88] sm:$0xff] %v1190
        %1223 = vst [vmem:[#allocation2 + $0x90] sm:$0xff] %v1191
        %1224 = vst [vmem:[#allocation2 + $0x98] sm:$0xff] %v1192
        %1225 = vst [vmem:[#allocation2 + $0xa0] sm:$0xff] %v1193
        %1226 = vst [vmem:[#allocation2 + $0xa8] sm:$0xff] %v1194
        %1227 = vst [vmem:[#allocation2 + $0xb0] sm:$0xff] %v1195
        %1228 = vst [vmem:[#allocation2 + $0xb8] sm:$0xff] %v1196
        %1229 = vst [vmem:[#allocation2 + $0xc0] sm:$0xff] %v1197
        %1230 = vst [vmem:[#allocation2 + $0xc8] sm:$0xff] %v1198
        %1231 = vst [vmem:[#allocation2 + $0xd0] sm:$0xff] %v1199
        %1232 = vst [vmem:[#allocation2 + $0xd8] sm:$0xff] %v1200
        %1233 = vst [vmem:[#allocation2 + $0xe0] sm:$0xff] %v1201
        %1234 = vst [vmem:[#allocation2 + $0xe8] sm:$0xff] %v1202
        %1235 = vst [vmem:[#allocation2 + $0xf0] sm:$0xff] %v1203
        %1236 = vst [vmem:[#allocation2 + $0xf8] sm:$0xff] %v1204
        %p1237 = scmp.eq.s32.totalorder %s30, 2
        // Predicated region
        $region69: #{_fused_call.1} parent=43 // pred_check
          %p1238 = pneg %p1237
        $region70: #{_fused_call.1} parent=43 // pred_check_branch
          %1240 = sbr.rel (%p1238) target = $region72
        $region71: #{_fused_call.1} parent=43 // pred_region
          %v1241 = vld [vmem:[#allocation2] sm:$0xff]
          %v1242 = vld [vmem:[#allocation2 + $0x8] sm:$0xff]
          %v1243 = vld [vmem:[#allocation2 + $0x10] sm:$0xff]
          %v1244 = vld [vmem:[#allocation2 + $0x18] sm:$0xff]
          %v1245 = vld [vmem:[#allocation2 + $0x20] sm:$0xff]
          %v1246 = vld [vmem:[#allocation2 + $0x28] sm:$0xff]
          %v1247 = vld [vmem:[#allocation2 + $0x30] sm:$0xff]
          %v1248 = vld [vmem:[#allocation2 + $0x38] sm:$0xff]
          %v1249 = vld [vmem:[#allocation2 + $0x40] sm:$0xff]
          %v1250 = vld [vmem:[#allocation2 + $0x48] sm:$0xff]
          %v1251 = vld [vmem:[#allocation2 + $0x50] sm:$0xff]
          %v1252 = vld [vmem:[#allocation2 + $0x58] sm:$0xff]
          %v1253 = vld [vmem:[#allocation2 + $0x60] sm:$0xff]
          %v1254 = vld [vmem:[#allocation2 + $0x68] sm:$0xff]
          %v1255 = vld [vmem:[#allocation2 + $0x70] sm:$0xff]
          %v1256 = vld [vmem:[#allocation2 + $0x78] sm:$0xff]
          %v1257 = vld [vmem:[#allocation2 + $0x80] sm:$0xff]
          %v1258 = vld [vmem:[#allocation2 + $0x88] sm:$0xff]
          %v1259 = vld [vmem:[#allocation2 + $0x90] sm:$0xff]
          %v1260 = vld [vmem:[#allocation2 + $0x98] sm:$0xff]
          %v1261 = vld [vmem:[#allocation2 + $0xa0] sm:$0xff]
          %v1262 = vld [vmem:[#allocation2 + $0xa8] sm:$0xff]
          %v1263 = vld [vmem:[#allocation2 + $0xb0] sm:$0xff]
          %v1264 = vld [vmem:[#allocation2 + $0xb8] sm:$0xff]
          %v1265 = vld [vmem:[#allocation2 + $0xc0] sm:$0xff]
          %v1266 = vld [vmem:[#allocation2 + $0xc8] sm:$0xff]
          %v1267 = vld [vmem:[#allocation2 + $0xd0] sm:$0xff]
          %v1268 = vld [vmem:[#allocation2 + $0xd8] sm:$0xff]
          %v1269 = vld [vmem:[#allocation2 + $0xe0] sm:$0xff]
          %v1270 = vld [vmem:[#allocation2 + $0xe8] sm:$0xff]
          %v1271 = vld [vmem:[#allocation2 + $0xf0] sm:$0xff]
          %v1272 = vld [vmem:[#allocation2 + $0xf8] sm:$0xff]
          %v1273 = vld [vmem:[%s423] sm:$0x3]
          %v1275 = vperm.slane %v1273, 0
          %v1276 = vperm.slane %v1273, 1
          %v1279 = vadd.f32 %v1241, %v1275
          %v1280 = vadd.f32 %v1242, %v1276
          %v1281 = vadd.f32 %v1243, %v1275
          %v1282 = vadd.f32 %v1244, %v1276
          %v1283 = vadd.f32 %v1245, %v1275
          %v1284 = vadd.f32 %v1246, %v1276
          %v1285 = vadd.f32 %v1247, %v1275
          %v1286 = vadd.f32 %v1248, %v1276
          %v1287 = vadd.f32 %v1249, %v1275
          %v1288 = vadd.f32 %v1250, %v1276
          %v1289 = vadd.f32 %v1251, %v1275
          %v1290 = vadd.f32 %v1252, %v1276
          %v1291 = vadd.f32 %v1253, %v1275
          %v1292 = vadd.f32 %v1254, %v1276
          %v1293 = vadd.f32 %v1255, %v1275
          %v1294 = vadd.f32 %v1256, %v1276
          %v1295 = vadd.f32 %v1257, %v1275
          %v1296 = vadd.f32 %v1258, %v1276
          %v1297 = vadd.f32 %v1259, %v1275
          %v1298 = vadd.f32 %v1260, %v1276
          %v1299 = vadd.f32 %v1261, %v1275
          %v1300 = vadd.f32 %v1262, %v1276
          %v1301 = vadd.f32 %v1263, %v1275
          %v1302 = vadd.f32 %v1264, %v1276
          %v1303 = vadd.f32 %v1265, %v1275
          %v1304 = vadd.f32 %v1266, %v1276
          %v1305 = vadd.f32 %v1267, %v1275
          %v1306 = vadd.f32 %v1268, %v1276
          %v1307 = vadd.f32 %v1269, %v1275
          %v1308 = vadd.f32 %v1270, %v1276
          %v1309 = vadd.f32 %v1271, %v1275
          %v1310 = vadd.f32 %v1272, %v1276
          %1311 = vst [vmem:[#allocation12] sm:$0xff] %v1279
          %1312 = vst [vmem:[#allocation12 + $0x8] sm:$0xff] %v1280
          %1313 = vst [vmem:[#allocation12 + $0x10] sm:$0xff] %v1281
          %1314 = vst [vmem:[#allocation12 + $0x18] sm:$0xff] %v1282
          %1315 = vst [vmem:[#allocation12 + $0x20] sm:$0xff] %v1283
          %1316 = vst [vmem:[#allocation12 + $0x28] sm:$0xff] %v1284
          %1317 = vst [vmem:[#allocation12 + $0x30] sm:$0xff] %v1285
          %1318 = vst [vmem:[#allocation12 + $0x38] sm:$0xff] %v1286
          %1319 = vst [vmem:[#allocation12 + $0x40] sm:$0xff] %v1287
          %1320 = vst [vmem:[#allocation12 + $0x48] sm:$0xff] %v1288
          %1321 = vst [vmem:[#allocation12 + $0x50] sm:$0xff] %v1289
          %1322 = vst [vmem:[#allocation12 + $0x58] sm:$0xff] %v1290
          %1323 = vst [vmem:[#allocation12 + $0x60] sm:$0xff] %v1291
          %1324 = vst [vmem:[#allocation12 + $0x68] sm:$0xff] %v1292
          %1325 = vst [vmem:[#allocation12 + $0x70] sm:$0xff] %v1293
          %1326 = vst [vmem:[#allocation12 + $0x78] sm:$0xff] %v1294
          %1327 = vst [vmem:[#allocation12 + $0x80] sm:$0xff] %v1295
          %1328 = vst [vmem:[#allocation12 + $0x88] sm:$0xff] %v1296
          %1329 = vst [vmem:[#allocation12 + $0x90] sm:$0xff] %v1297
          %1330 = vst [vmem:[#allocation12 + $0x98] sm:$0xff] %v1298
          %1331 = vst [vmem:[#allocation12 + $0xa0] sm:$0xff] %v1299
          %1332 = vst [vmem:[#allocation12 + $0xa8] sm:$0xff] %v1300
          %1333 = vst [vmem:[#allocation12 + $0xb0] sm:$0xff] %v1301
          %1334 = vst [vmem:[#allocation12 + $0xb8] sm:$0xff] %v1302
          %1335 = vst [vmem:[#allocation12 + $0xc0] sm:$0xff] %v1303
          %1336 = vst [vmem:[#allocation12 + $0xc8] sm:$0xff] %v1304
          %1337 = vst [vmem:[#allocation12 + $0xd0] sm:$0xff] %v1305
          %1338 = vst [vmem:[#allocation12 + $0xd8] sm:$0xff] %v1306
          %1339 = vst [vmem:[#allocation12 + $0xe0] sm:$0xff] %v1307
          %1340 = vst [vmem:[#allocation12 + $0xe8] sm:$0xff] %v1308
          %1341 = vst [vmem:[#allocation12 + $0xf0] sm:$0xff] %v1309
          %1342 = vst [vmem:[#allocation12 + $0xf8] sm:$0xff] %v1310
        $region72: #{_fused_call.1} parent=43 // pred_fallthru
          _
        // Predicated region
        $region73: #{_fused_call.1} parent=43 // pred_check
          %p1343 = pneg %p208
        $region74: #{_fused_call.1} parent=43 // pred_check_branch
          %1345 = sbr.rel (%p1343) target = $region76
        $region75: #{_fused_call.1} parent=43 // pred_region
          %s1346 = smul.u32 2, %s29
          %1348 = vsyncadd [#allocation5], 0
          %s1349 = smul.addr %s1346, 8
          %s1350 = scalar_lea.hbm %s6, %s1349
          %s1351 = sshll.u32 [#allocation12], 4
          %s1352 = int_to_ptr.vmem [resolvable:$true] %s1351
          %s1353 = sshll.u32 %s1350, 4
          %s1354 = int_to_ptr.hbm [resolvable:$true] %s1353
          %1359 = dma.vmem_to_hbm [thread:$0]  %s1352, 4096, %s1354, [#allocation5], 256, 256, 16
        $region76: #{_fused_call.1} parent=43 // pred_fallthru
          _
        // Predicated region
        $region77: #{_fused_call.1} parent=43 // pred_check
          %p1360 = pneg %p208
        $region78: #{_fused_call.1} parent=43 // pred_check_branch
          %1362 = sbr.rel (%p1360) target = $region80
        $region79: #{_fused_call.1} parent=43 // pred_region
          %1364 = dma.done [#allocation5], 4096
        $region80: #{_fused_call.1} parent=43 // pred_fallthru
          _
      $region44: #{_fused_call.1} parent=5 // pred_fallthru
        _
      %p1365 = scmp.le.s32.totalorder 2, %s20
      // Predicated region
      $region81: #{_fused_call.1} parent=5 // pred_check
        %p1366 = pneg %p1365
      $region82: #{_fused_call.1} parent=5 // pred_check_branch
        %1368 = sbr.rel (%p1366) target = $region84
      $region83: #{_fused_call.1} parent=5 // pred_region
        %s1369 = ssub.s32 %s20, 2
      $region84: #{_fused_call.1} parent=5 // pred_fallthru
        _
    $region6: #{_fused_call.1} parent=1 // loop_footer
      %s24 = sadd.s32 1, %s20
    $region7: #{_fused_call.1} parent=1 // loop_footer_branch
      %19 = sbr.rel target = $region3
    $region8: #{_fused_call.1} parent=1 // loop_exit
      _
    %1370 = vsyncpa [#allocation4], 1
    %s1371 = scalar_lea.sflag [#allocation4], 1
    %1372 = vsyncpa %s1371, 1
    %1373 = vsyncpa [#allocation7], 1
    %s1374 = scalar_lea.sflag [#allocation7], 1
    %1375 = vsyncpa %s1374, 1
    %1376 = vsyncpa [#allocation10], 1
    %s1377 = scalar_lea.sflag [#allocation10], 1
    %1378 = vsyncpa %s1377, 1
    %1379 = vsyncpa [#allocation5], 1
    %s1380 = scalar_lea.sflag [#allocation5], 1
    %1381 = vsyncpa %s1380, 1

</llo_original>
